<compile_context>
chip_gen: v7x
topology: tpu7x:2x2x1
jax: 0.10.0
libtpu: 0.0.40
codegen_flags: <defaults>
</compile_context>

<pallas_src>
import functools
import numpy as np
import jax
import jax.numpy as jnp
from jax.experimental import pallas as pl
from jax.experimental.pallas import tpu as pltpu

# ----------------------------- MANO constants -------------------------------
NV = 778            # number of mesh vertices
NVP = 896           # vertices padded to 7*128 (lane-dense)
NJ = 16             # number of kinematic joints
NPOSE = 45          # hand pose dimensionality (15 joints * 3 axis-angle)
NBETAS = 10         # shape parameters
ROT = 3             # global rotation dims
NCOMPS = 6          # PCA components used
VCP = 3 * NVP       # 2688 : coordinate-major flattened width (flat = c*NVP + v)
NK = NBETAS + NPOSE * 3 + 1   # 146 : [betas | pose_map | 1]
KF = 160            # NK padded up (nice multiple of 16 for bf16 sublanes)


def _round_up(x, m):
    return ((x + m - 1) // m) * m


def _batch_tile(batch, cap=64, align=16):
    """Pick (tile, padded_batch): tile divides padded_batch, 16-aligned for bf16,
    and >=2 grid steps whenever the padded batch allows (v7x megacore)."""
    bpad = _round_up(max(batch, align), align)
    if bpad >= 2 * align:
        tile = min(cap, bpad // 2)
        tile = max(align, (tile // align) * align)
    else:
        tile = bpad
    bpad = _round_up(bpad, tile)
    return tile, bpad


def _pad_rows(x, rows):
    if x.shape[0] == rows:
        return x
    pad = jnp.zeros((rows - x.shape[0],) + x.shape[1:], x.dtype)
    return jnp.concatenate([x, pad], axis=0)


# ----------------------------- Pallas kernels -------------------------------
def _blend_kernel(x_ref, w_ref, vp_ref):
    # x_ref : (TB, KF)  bf16   [betas | pose_map | 1 | 0-pad]
    # w_ref : (KF, VCP) bf16   [shapedirs ; posedirs ; v_template ; 0-pad]
    # vp_ref: (TB, VCP) bf16   coordinate-major posed vertices
    vp_ref[...] = jnp.dot(x_ref[...], w_ref[...],
                          preferred_element_type=jnp.float32).astype(vp_ref.dtype)


def _skin_kernel(a2_ref, vp_ref, wt_ref, out_ref, *, tb):
    # a2_ref : (12*TB, 16) bf16  rows packed as (i*4 + c)*TB + b, i in {0,1,2}
    # vp_ref : (TB, VCP)   bf16  coordinate-major posed vertices
    # wt_ref : (16, NVP)   bf16  transposed skinning weights
    # out    : (TB, VCP)   f32   coordinate-major skinned vertices
    m = jnp.dot(a2_ref[...], wt_ref[...],
                preferred_element_type=jnp.float32)          # (12*TB, NVP), 1 MXU call
    vx = vp_ref[:, 0:NVP].astype(jnp.float32)                # 128-aligned lane slices
    vy = vp_ref[:, NVP:2 * NVP].astype(jnp.float32)
    vz = vp_ref[:, 2 * NVP:3 * NVP].astype(jnp.float32)
    for i in range(3):                                       # 3 output coordinates
        base = 4 * i * tb                                    # slab offsets, tb-aligned
        t0 = m[base:base + tb]                               # T[.., i, j=0]
        t1 = m[base + tb:base + 2 * tb]                      # T[.., i, j=1]
        t2 = m[base + 2 * tb:base + 3 * tb]                  # T[.., i, j=2]
        t3 = m[base + 3 * tb:base + 4 * tb]                  # T[.., i, j=3] (translation)
        out_ref[:, i * NVP:(i + 1) * NVP] = t3 + t0 * vx + t1 * vy + t2 * vz


def blend_pallas(x_bf16, w_fused, tb, bpad):
    nblk = bpad // tb
    ce = pl.CostEstimate(
        flops=2 * bpad * KF * VCP,
        transcendentals=0,
        bytes_accessed=bpad * KF * 2 + KF * VCP * 2 + bpad * VCP * 2)
    return pl.pallas_call(
        _blend_kernel,
        out_shape=jax.ShapeDtypeStruct((bpad, VCP), jnp.bfloat16),
        grid=(nblk,),
        in_specs=[pl.BlockSpec((tb, KF), lambda i: (i, 0)),
                  pl.BlockSpec((KF, VCP), lambda i: (0, 0))],
        out_specs=pl.BlockSpec((tb, VCP), lambda i: (i, 0)),
        compiler_params=pltpu.CompilerParams(
            dimension_semantics=("parallel",)),
        cost_estimate=ce,
    )(x_bf16, w_fused)


def skin_pallas(a2, vp, wt, tb, bpad):
    nblk = bpad // tb
    ce = pl.CostEstimate(
        flops=2 * bpad * 12 * NJ * NVP + 6 * bpad * 3 * NVP,
        transcendentals=0,
        bytes_accessed=bpad * 12 * NJ * 2 + bpad * VCP * 2
                       + NJ * NVP * 2 + bpad * VCP * 4)
    return pl.pallas_call(
        functools.partial(_skin_kernel, tb=tb),
        out_shape=jax.ShapeDtypeStruct((bpad, VCP), jnp.float32),
        grid=(nblk,),
        in_specs=[pl.BlockSpec((12 * tb, NJ), lambda i: (i, 0)),
                  pl.BlockSpec((tb, VCP), lambda i: (i, 0)),
                  pl.BlockSpec((NJ, NVP), lambda i: (0, 0))],
        out_specs=pl.BlockSpec((tb, VCP), lambda i: (i, 0)),
        compiler_params=pltpu.CompilerParams(
            dimension_semantics=("parallel",)),
        cost_estimate=ce,
    )(a2, vp, wt)


# ----------------------------- JAX glue (small ops) --------------------------
def quat2mat(quat):
    q = quat / jnp.linalg.norm(quat, axis=1, keepdims=True)
    w, x, y, z = q[:, 0], q[:, 1], q[:, 2], q[:, 3]
    w2, x2, y2, z2 = w * w, x * x, y * y, z * z
    wx, wy, wz = w * x, w * y, w * z
    xy, xz, yz = x * y, x * z, y * z
    rot = jnp.stack([w2 + x2 - y2 - z2, 2 * xy - 2 * wz, 2 * wy + 2 * xz,
                     2 * wz + 2 * xy, w2 - x2 + y2 - z2, 2 * yz - 2 * wx,
                     2 * xz - 2 * wy, 2 * wx + 2 * yz, w2 - x2 - y2 + z2],
                    axis=1)
    return rot.reshape(-1, 3, 3)


def batch_rodrigues(axisang):
    # axisang: (N, 3)  (matches manopth: epsilon added to the vector, not the norm)
    norm = jnp.linalg.norm(axisang + 1e-8, axis=1, keepdims=True)
    normalized = axisang / norm
    angle = norm * 0.5
    quat = jnp.concatenate([jnp.cos(angle), jnp.sin(angle) * normalized], axis=1)
    return quat2mat(quat)


def with_zeros(mat):
    # mat: (N, 3, 4) -> (N, 4, 4) appending [0, 0, 0, 1]
    n = mat.shape[0]
    row = jnp.broadcast_to(
        jnp.array([[[0.0, 0.0, 0.0, 1.0]]], dtype=mat.dtype), (n, 1, 4))
    return jnp.concatenate([mat, row], axis=1)


# ----------------------------- ManoLayer (JAX/Pallas) ------------------------
class ManoLayerPallas:
    def __init__(self, key, root_idx=0, flat_hand_mean=True, ncomps=NCOMPS,
                 hand_side='right', scale_milimeter=True):
        self.root_idx = root_idx
        self.rot = ROT
        self.ncomps = ncomps
        self.hand_side = hand_side
        self.scale_milimeter = scale_milimeter
        hp = jax.lax.Precision.HIGHEST

        # Synthetic deterministic MANO-like parameters (same shapes as the real
        # pickle buffers).  TODO(synk): real MANO .pkl buffers not loaded.
        ks = jax.random.split(key, 7)
        shapedirs = jax.random.normal(ks[0], (NV, 3, NBETAS), jnp.float32) * 1e-2
        posedirs = jax.random.normal(ks[1], (NV, 3, NPOSE * 3), jnp.float32) * 1e-3
        v_template = jax.random.normal(ks[2], (NV, 3), jnp.float32) * 1e-1
        j_regressor = jax.nn.softmax(
            jax.random.normal(ks[3], (NJ, NV), jnp.float32), axis=1)
        weights = jax.nn.softmax(
            jax.random.normal(ks[4], (NV, NJ), jnp.float32) * 2.0, axis=1)
        hands_components = jax.random.normal(ks[5], (NPOSE, NPOSE), jnp.float32) * 0.5
        hands_mean = (jnp.zeros((NPOSE,), jnp.float32) if flat_hand_mean
                      else jax.random.normal(ks[6], (NPOSE,), jnp.float32) * 0.1)

        self.th_selected_comps = hands_components[:ncomps]          # (6, 45)
        self.th_hands_mean = hands_mean[None]                        # (1, 45)

        # f32 originals kept for the pure-JAX reference path
        self.shapedirs = shapedirs
        self.posedirs = posedirs
        self.v_template = v_template
        self.j_regressor = j_regressor
        self.th_weights = weights

        padv = NVP - NV
        # ---- fused blend weight: [shapedirs ; posedirs ; v_template ; 0] bf16 ----
        sd_cm = jnp.pad(jnp.transpose(shapedirs, (2, 1, 0)),
                        ((0, 0), (0, 0), (0, padv))).reshape(NBETAS, VCP)
        pd_cm = jnp.pad(jnp.transpose(posedirs, (2, 1, 0)),
                        ((0, 0), (0, 0), (0, padv))).reshape(NPOSE * 3, VCP)
        vt_cm = jnp.pad(v_template.T, ((0, 0), (0, padv))).reshape(1, VCP)
        w = jnp.concatenate(
            [sd_cm, pd_cm, vt_cm, jnp.zeros((KF - NK, VCP), jnp.float32)], axis=0)
        self.w_fused = w.astype(jnp.bfloat16)                        # (160, VCP)

        # ---- pre-composed joint regressor (f32, BEFORE any bf16 cast) ----------
        self.sdJ = jnp.einsum('vck,jv->kjc', shapedirs, j_regressor,
                              precision=hp)                          # (10, 16, 3)
        self.vtJ = jnp.einsum('jv,vc->jc', j_regressor, v_template,
                              precision=hp)                          # (16, 3)

        # ---- transposed skinning weights, lane-padded, bf16 for the MXU --------
        self.wtT = jnp.pad(weights.T, ((0, 0), (0, padv))).astype(jnp.bfloat16)

    def __call__(self, th_pose_coeffs, th_betas, poses_root=None,
                 use_pallas=True):
        B = th_pose_coeffs.shape[0]
        hp = jax.lax.Precision.HIGHEST

        # ---- pose PCA -> full pose -----------------------------------------
        hand_pose = th_pose_coeffs[:, self.rot:self.rot + self.ncomps]
        full_hand_pose = jnp.dot(hand_pose, self.th_selected_comps, precision=hp)
        full_pose = jnp.concatenate(
            [th_pose_coeffs[:, :self.rot], self.th_hands_mean + full_hand_pose],
            axis=1)                                                  # (B, 48)

        # ---- Rodrigues (glue) ------------------------------------------------
        rot_all = batch_rodrigues(full_pose.reshape(-1, 3)).reshape(B, NJ, 3, 3)
        root_rot = rot_all[:, 0]                                     # (B, 3, 3)
        pose_map = (rot_all[:, 1:] -
                    jnp.eye(3, dtype=rot_all.dtype)).reshape(B, NPOSE * 3)

        # ---- blend shapes (Pallas) + pre-composed joint regression -----------
        if use_pallas:
            tb, bpad = _batch_tile(B)
            x = jnp.concatenate(
                [th_betas, pose_map, jnp.ones((B, 1), th_betas.dtype)], axis=1)
            x = jnp.pad(x, ((0, bpad - B), (0, KF - NK))).astype(jnp.bfloat16)
            vp = blend_pallas(x, self.w_fused, tb, bpad)             # (bpad, VCP) bf16
            th_j = jnp.einsum('bk,kjc->bjc', th_betas, self.sdJ,
                              precision=hp) + self.vtJ[None]         # (B, 16, 3) f32
        else:
            v_shaped = jnp.einsum('vck,bk->bvc', self.shapedirs, th_betas,
                                  precision=hp) + self.v_template[None]
            th_j = jnp.einsum('jv,bvc->bjc', self.j_regressor, v_shaped,
                              precision=hp)                          # (B, 16, 3)
            v_posed = v_shaped + jnp.einsum('vcp,bp->bvc', self.posedirs,
                                            pose_map, precision=hp)

        # ---- kinematic chain (tiny 4x4 math, glue) ---------------------------
        root_j = th_j[:, 0].reshape(B, 3, 1)
        root_trans = with_zeros(jnp.concatenate([root_rot, root_j], axis=2))
        all_rots = rot_all[:, 1:]                                    # (B, 15, 3, 3)
        lev1_idxs = [1, 4, 7, 10, 13]
        lev2_idxs = [2, 5, 8, 11, 14]
        lev3_idxs = [3, 6, 9, 12, 15]
        lev1_rots = all_rots[:, [i - 1 for i in lev1_idxs]]
        lev2_rots = all_rots[:, [i - 1 for i in lev2_idxs]]
        lev3_rots = all_rots[:, [i - 1 for i in lev3_idxs]]
        lev1_j = th_j[:, jnp.array(lev1_idxs)]
        lev2_j = th_j[:, jnp.array(lev2_idxs)]
        lev3_j = th_j[:, jnp.array(lev3_idxs)]

        all_transforms = [root_trans[:, None]]
        lev1_j_rel = lev1_j - jnp.transpose(root_j, (0, 2, 1))
        lev1_rel = with_zeros(jnp.concatenate(
            [lev1_rots, lev1_j_rel[..., None]], axis=3).reshape(-1, 3, 4))
        root_trans_flt = jnp.tile(root_trans[:, None],
                                  (1, 5, 1, 1)).reshape(B * 5, 4, 4)
        lev1_flt = jnp.matmul(root_trans_flt, lev1_rel, precision=hp)
        all_transforms.append(lev1_flt.reshape(B, 5, 4, 4))

        lev2_j_rel = lev2_j - lev1_j
        lev2_rel = with_zeros(jnp.concatenate(
            [lev2_rots, lev2_j_rel[..., None]], axis=3).reshape(-1, 3, 4))
        lev2_flt = jnp.matmul(lev1_flt, lev2_rel, precision=hp)
        all_transforms.append(lev2_flt.reshape(B, 5, 4, 4))

        lev3_j_rel = lev3_j - lev2_j
        lev3_rel = with_zeros(jnp.concatenate(
            [lev3_rots, lev3_j_rel[..., None]], axis=3).reshape(-1, 3, 4))
        lev3_flt = jnp.matmul(lev2_flt, lev3_rel, precision=hp)
        all_transforms.append(lev3_flt.reshape(B, 5, 4, 4))

        reorder = jnp.array([0, 1, 6, 11, 2, 7, 12, 3, 8, 13, 4, 9, 14, 5, 10, 15])
        th_results = jnp.concatenate(all_transforms, axis=1)[:, reorder]
        th_results_global = th_results                               # (B, 16, 4, 4)

        joint_js = jnp.concatenate(
            [th_j, jnp.zeros((B, NJ, 1), th_j.dtype)], axis=2)       # (B, 16, 4)
        tmp2 = jnp.einsum('bkij,bkj->bki', th_results, joint_js, precision=hp)
        r2 = th_results - jnp.concatenate(
            [jnp.zeros((B, NJ, 4, 3), th_results.dtype), tmp2[..., None]], axis=3)

        # ---- linear blend skinning (Pallas hot path) --------------------------
        if use_pallas:
            nblk = bpad // tb
            r2_p = _pad_rows(r2, bpad)                               # (bpad, 16, 4, 4)
            # (i, jcol)-major packing: row = g*12*tb + (i*4+c)*tb + b_local
            a2 = jnp.transpose(r2_p[:, :, :3, :], (2, 3, 0, 1))      # (3, 4, bpad, 16)
            a2 = a2.reshape(3, 4, nblk, tb, NJ)
            a2 = jnp.transpose(a2, (2, 0, 1, 3, 4)).reshape(nblk * 12 * tb, NJ)
            a2 = a2.astype(jnp.bfloat16)
            out = skin_pallas(a2, vp, self.wtT, tb, bpad)            # (bpad, VCP) f32
            th_verts = jnp.transpose(
                out[:B].reshape(B, 3, NVP)[:, :, :NV], (0, 2, 1))    # (B, NV, 3)
        else:
            rest_h = jnp.concatenate(
                [v_posed, jnp.ones((B, NV, 1), v_posed.dtype)], axis=2)
            th_verts = jnp.einsum('vk,bkij,bvj->bvi', self.th_weights, r2,
                                  rest_h, precision=hp)[:, :, :3]

        th_jtr = th_results_global[:, :, :3, 3]

        if self.hand_side == 'right':
            tips = th_verts[:, jnp.array([745, 317, 444, 556, 673])]
        else:
            tips = th_verts[:, jnp.array([745, 317, 445, 556, 673])]
        th_jtr = jnp.concatenate([th_jtr, tips], axis=1)
        th_jtr = th_jtr[:, jnp.array([0, 13, 14, 15, 16, 1, 2, 3, 17, 4, 5, 6,
                                      18, 10, 11, 12, 19, 7, 8, 9, 20])]

        root_joint = th_jtr[:, self.root_idx][:, None]
        th_jtr = th_jtr - root_joint
        th_verts = th_verts - root_joint
        if poses_root is not None:
            th_jtr = th_jtr + poses_root[:, None]
            th_verts = th_verts + poses_root[:, None]
        if self.scale_milimeter:
            th_verts = th_verts * 1000.0
            th_jtr = th_jtr * 1000.0
        return th_verts, th_jtr


# ----------------------------------- main ------------------------------------
if __name__ == "__main__":
    key = jax.random.PRNGKey(0)
    k_params, k_pose, k_betas = jax.random.split(key, 3)

    layer = ManoLayerPallas(k_params)

    B = 2
    th_pose_coeffs = jax.random.normal(k_pose, (B, ROT + NCOMPS), jnp.float32) * 0.3
    th_betas = jax.random.normal(k_betas, (B, NBETAS), jnp.float32) * 0.5

    fwd = jax.jit(lambda p, b: layer(p, b, use_pallas=True))
    verts, jtr = fwd(th_pose_coeffs, th_betas)
    verts = jax.block_until_ready(verts)
    jtr = jax.block_until_ready(jtr)

    # pure-JAX f32 reference (faithful translation of the PyTorch forward)
    verts_ref, jtr_ref = layer(th_pose_coeffs, th_betas, use_pallas=False)
    verts_ref = jax.block_until_ready(verts_ref)
    jtr_ref = jax.block_until_ready(jtr_ref)

    assert verts.shape == (B, NV, 3) and jtr.shape == (B, 21, 3)
    # Fast path uses bf16 MXU operands (fused blend weight incl. template, vp
    # intermediate, skin transforms/weights) vs a pure f32 reference: expect a
    # couple of millimetres worst case on a ~hundreds-of-mm hand (units are mm).
    np.testing.assert_allclose(np.asarray(verts), np.asarray(verts_ref),
                               rtol=2e-2, atol=3.0)
    np.testing.assert_allclose(np.asarray(jtr), np.asarray(jtr_ref),
                               rtol=2e-2, atol=3.0)
    print("KERNEL_OK")
</pallas_src>

<mosaic_0001>
module attributes {stable_mosaic.version = 11 : i64} {
  func.func @_blend_kernel(%arg0: i32, %arg1: memref<16x160xbf16, #tpu.memory_space<vmem>>, %arg2: memref<160x2688xbf16, #tpu.memory_space<vmem>>, %arg3: memref<16x2688xbf16, #tpu.memory_space<vmem>>) attributes {dimension_semantics = [#tpu.dimension_semantics<parallel>], iteration_bounds = array<i64: 1>, scalar_prefetch = 0 : i64, scratch_operands = 0 : i64, tpu.core_type = #tpu.core_type<tc>, window_params = [{transform_indices = @transform_0, window_bounds = array<i64: 16, 160>}, {pipeline_mode = #tpu.pipeline_mode<synchronous>, transform_indices = @transform_1, window_bounds = array<i64: 160, 2688>}, {transform_indices = @transform_2, window_bounds = array<i64: 16, 2688>}]} {
    %c0 = arith.constant 0 : index
    %c0_0 = arith.constant 0 : index
    %0 = vector.load %arg1[%c0, %c0_0] : memref<16x160xbf16, #tpu.memory_space<vmem>>, vector<16x160xbf16>
    %c0_1 = arith.constant 0 : index
    %c0_2 = arith.constant 0 : index
    %1 = vector.load %arg2[%c0_1, %c0_2] : memref<160x2688xbf16, #tpu.memory_space<vmem>>, vector<160x2688xbf16>
    %cst = arith.constant dense<0.000000e+00> : vector<16x2688xf32>
    %2 = tpu.matmul %0, %1, %cst {dimension_numbers = #tpu.dot_dimension_numbers<[1], [0], [0], [1], [0, 0, 1, 1], [], []>} : vector<16x160xbf16>, vector<160x2688xbf16>, vector<16x2688xf32> -> vector<16x2688xf32>
    %3 = arith.truncf %2 : vector<16x2688xf32> to vector<16x2688xbf16>
    %c0_3 = arith.constant 0 : index
    %c0_4 = arith.constant 0 : index
    %4 = vector.load %arg3[%c0_3, %c0_4] : memref<16x2688xbf16, #tpu.memory_space<vmem>>, vector<16x2688xbf16>
    tpu.vector_store %arg3[%c0_3, %c0_4], %3 {strides = array<i32>} : memref<16x2688xbf16, #tpu.memory_space<vmem>>, vector<16x2688xbf16>,
    return
  }
  func.func @transform_0(%arg0: i32) -> (i32, i32) {
    %c0_i32 = arith.constant 0 : i32
    %c0_i32_0 = arith.constant 0 : i32
    return %arg0, %c0_i32 : i32, i32
  }
  func.func @transform_1(%arg0: i32) -> (i32, i32) {
    %c0_i32 = arith.constant 0 : i32
    %c0_i32_0 = arith.constant 0 : i32
    %c0_i32_1 = arith.constant 0 : i32
    return %c0_i32, %c0_i32_0 : i32, i32
  }
  func.func @transform_2(%arg0: i32) -> (i32, i32) {
    %c0_i32 = arith.constant 0 : i32
    %c0_i32_0 = arith.constant 0 : i32
    return %arg0, %c0_i32 : i32, i32
  }
}

module attributes {stable_mosaic.version = 11 : i64} {
  func.func @_skin_kernel(%arg0: i32, %arg1: memref<192x16xbf16, #tpu.memory_space<vmem>>, %arg2: memref<16x2688xbf16, #tpu.memory_space<vmem>>, %arg3: memref<16x896xbf16, #tpu.memory_space<vmem>>, %arg4: memref<16x2688xf32, #tpu.memory_space<vmem>>) attributes {dimension_semantics = [#tpu.dimension_semantics<parallel>], iteration_bounds = array<i64: 1>, scalar_prefetch = 0 : i64, scratch_operands = 0 : i64, tpu.core_type = #tpu.core_type<tc>, window_params = [{transform_indices = @transform_0, window_bounds = array<i64: 192, 16>}, {transform_indices = @transform_1, window_bounds = array<i64: 16, 2688>}, {pipeline_mode = #tpu.pipeline_mode<synchronous>, transform_indices = @transform_2, window_bounds = array<i64: 16, 896>}, {transform_indices = @transform_3, window_bounds = array<i64: 16, 2688>}]} {
    %c0 = arith.constant 0 : index
    %c0_0 = arith.constant 0 : index
    %0 = vector.load %arg1[%c0, %c0_0] : memref<192x16xbf16, #tpu.memory_space<vmem>>, vector<192x16xbf16>
    %c0_1 = arith.constant 0 : index
    %c0_2 = arith.constant 0 : index
    %1 = vector.load %arg3[%c0_1, %c0_2] : memref<16x896xbf16, #tpu.memory_space<vmem>>, vector<16x896xbf16>
    %cst = arith.constant dense<0.000000e+00> : vector<192x896xf32>
    %2 = tpu.matmul %0, %1, %cst {dimension_numbers = #tpu.dot_dimension_numbers<[1], [0], [0], [1], [0, 0, 1, 1], [], []>} : vector<192x16xbf16>, vector<16x896xbf16>, vector<192x896xf32> -> vector<192x896xf32>
    %c0_3 = arith.constant 0 : index
    %c0_4 = arith.constant 0 : index
    %3 = vector.load %arg2[%c0_3, %c0_4] : memref<16x2688xbf16, #tpu.memory_space<vmem>>, vector<16x896xbf16>
    %4 = arith.extf %3 : vector<16x896xbf16> to vector<16x896xf32>
    %c0_5 = arith.constant 0 : index
    %c896 = arith.constant 896 : index
    %5 = vector.load %arg2[%c0_5, %c896] : memref<16x2688xbf16, #tpu.memory_space<vmem>>, vector<16x896xbf16>
    %6 = arith.extf %5 : vector<16x896xbf16> to vector<16x896xf32>
    %c0_6 = arith.constant 0 : index
    %c1792 = arith.constant 1792 : index
    %7 = vector.load %arg2[%c0_6, %c1792] : memref<16x2688xbf16, #tpu.memory_space<vmem>>, vector<16x896xbf16>
    %8 = arith.extf %7 : vector<16x896xbf16> to vector<16x896xf32>
    %9 = vector.extract_strided_slice %2 {offsets = [0, 0], sizes = [16, 896], strides = [1, 1]} : vector<192x896xf32> to vector<16x896xf32>
    %10 = vector.extract_strided_slice %2 {offsets = [16, 0], sizes = [16, 896], strides = [1, 1]} : vector<192x896xf32> to vector<16x896xf32>
    %11 = vector.extract_strided_slice %2 {offsets = [32, 0], sizes = [16, 896], strides = [1, 1]} : vector<192x896xf32> to vector<16x896xf32>
    %12 = vector.extract_strided_slice %2 {offsets = [48, 0], sizes = [16, 896], strides = [1, 1]} : vector<192x896xf32> to vector<16x896xf32>
    %13 = arith.mulf %9, %4 : vector<16x896xf32>
    %14 = arith.addf %12, %13 : vector<16x896xf32>
    %15 = arith.mulf %10, %6 : vector<16x896xf32>
    %16 = arith.addf %14, %15 : vector<16x896xf32>
    %17 = arith.mulf %11, %8 : vector<16x896xf32>
    %18 = arith.addf %16, %17 : vector<16x896xf32>
    %c0_7 = arith.constant 0 : index
    %c0_8 = arith.constant 0 : index
    %19 = vector.load %arg4[%c0_7, %c0_8] : memref<16x2688xf32, #tpu.memory_space<vmem>>, vector<16x896xf32>
    tpu.vector_store %arg4[%c0_7, %c0_8], %18 {strides = array<i32>} : memref<16x2688xf32, #tpu.memory_space<vmem>>, vector<16x896xf32>,
    %20 = vector.extract_strided_slice %2 {offsets = [64, 0], sizes = [16, 896], strides = [1, 1]} : vector<192x896xf32> to vector<16x896xf32>
    %21 = vector.extract_strided_slice %2 {offsets = [80, 0], sizes = [16, 896], strides = [1, 1]} : vector<192x896xf32> to vector<16x896xf32>
    %22 = vector.extract_strided_slice %2 {offsets = [96, 0], sizes = [16, 896], strides = [1, 1]} : vector<192x896xf32> to vector<16x896xf32>
    %23 = vector.extract_strided_slice %2 {offsets = [112, 0], sizes = [16, 896], strides = [1, 1]} : vector<192x896xf32> to vector<16x896xf32>
    %24 = arith.mulf %20, %4 : vector<16x896xf32>
    %25 = arith.addf %23, %24 : vector<16x896xf32>
    %26 = arith.mulf %21, %6 : vector<16x896xf32>
    %27 = arith.addf %25, %26 : vector<16x896xf32>
    %28 = arith.mulf %22, %8 : vector<16x896xf32>
    %29 = arith.addf %27, %28 : vector<16x896xf32>
    %c0_9 = arith.constant 0 : index
    %c896_10 = arith.constant 896 : index
    %30 = vector.load %arg4[%c0_9, %c896_10] : memref<16x2688xf32, #tpu.memory_space<vmem>>, vector<16x896xf32>
    tpu.vector_store %arg4[%c0_9, %c896_10], %29 {strides = array<i32>} : memref<16x2688xf32, #tpu.memory_space<vmem>>, vector<16x896xf32>,
    %31 = vector.extract_strided_slice %2 {offsets = [128, 0], sizes = [16, 896], strides = [1, 1]} : vector<192x896xf32> to vector<16x896xf32>
    %32 = vector.extract_strided_slice %2 {offsets = [144, 0], sizes = [16, 896], strides = [1, 1]} : vector<192x896xf32> to vector<16x896xf32>
    %33 = vector.extract_strided_slice %2 {offsets = [160, 0], sizes = [16, 896], strides = [1, 1]} : vector<192x896xf32> to vector<16x896xf32>
    %34 = vector.extract_strided_slice %2 {offsets = [176, 0], sizes = [16, 896], strides = [1, 1]} : vector<192x896xf32> to vector<16x896xf32>
    %35 = arith.mulf %31, %4 : vector<16x896xf32>
    %36 = arith.addf %34, %35 : vector<16x896xf32>
    %37 = arith.mulf %32, %6 : vector<16x896xf32>
    %38 = arith.addf %36, %37 : vector<16x896xf32>
    %39 = arith.mulf %33, %8 : vector<16x896xf32>
    %40 = arith.addf %38, %39 : vector<16x896xf32>
    %c0_11 = arith.constant 0 : index
    %c1792_12 = arith.constant 1792 : index
    %41 = vector.load %arg4[%c0_11, %c1792_12] : memref<16x2688xf32, #tpu.memory_space<vmem>>, vector<16x896xf32>
    tpu.vector_store %arg4[%c0_11, %c1792_12], %40 {strides = array<i32>} : memref<16x2688xf32, #tpu.memory_space<vmem>>, vector<16x896xf32>,
    return
  }
  func.func @transform_0(%arg0: i32) -> (i32, i32) {
    %c0_i32 = arith.constant 0 : i32
    %c0_i32_0 = arith.constant 0 : i32
    return %arg0, %c0_i32 : i32, i32
  }
  func.func @transform_1(%arg0: i32) -> (i32, i32) {
    %c0_i32 = arith.constant 0 : i32
    %c0_i32_0 = arith.constant 0 : i32
    return %arg0, %c0_i32 : i32, i32
  }
  func.func @transform_2(%arg0: i32) -> (i32, i32) {
    %c0_i32 = arith.constant 0 : i32
    %c0_i32_0 = arith.constant 0 : i32
    %c0_i32_1 = arith.constant 0 : i32
    return %c0_i32, %c0_i32_0 : i32, i32
  }
  func.func @transform_3(%arg0: i32) -> (i32, i32) {
    %c0_i32 = arith.constant 0 : i32
    %c0_i32_0 = arith.constant 0 : i32
    return %arg0, %c0_i32 : i32, i32
  }
}

</mosaic_0001>

<llo_original>
// kernel: _lambda_.2
$region0: #{_lambda_.2}
  #allocation0 [shape = 'u32[]', space=smem, size = 0x4, offset = 0x4, fixed_abs, tag = 'smem constant byte address 0x4 - core index']
  #allocation1 [shape = 'u32[144,128]{1,0:T(1,128)}', space=vmem, size = 0x12000, scoped, tag = 'internal scratch']
  %s0 = inlined_call_operand.vmem [shape: bf16[16,160], index: 0, kind: input, shape index: {}]
  %s1 = inlined_call_operand.vmem [shape: bf16[160,2688], index: 1, kind: input, shape index: {}]
  %s2 = inlined_call_operand.vmem [shape: bf16[16,2688], index: 2, kind: output, shape index: {}]
  %s3 = sld [smem:[#allocation0]]
  $region18: #{_lambda_.2} parent=0
    _
  %s5 = ssub.s32 1, %s3
  %s6 = scalar_select 0, %s5, %s3
  // Predicated region
  $region2: #{_lambda_.2} parent=0 // pred_check
    _
  $region3: #{_lambda_.2} parent=0 // pred_check_branch
    %8 = sbr.rel (0) target = $region5
  $region4: #{_lambda_.2} parent=0 // pred_region
    _
  $region5: #{_lambda_.2} parent=0 // pred_fallthru
    _
  // Predicated region
  $region6: #{_lambda_.2} parent=0 // pred_check
    _
  $region7: #{_lambda_.2} parent=0 // pred_check_branch
    %10 = sbr.rel (0) target = $region9
  $region8: #{_lambda_.2} parent=0 // pred_region
    _
  $region9: #{_lambda_.2} parent=0 // pred_fallthru
    _
  %v12 = vld [vmem:[%s0] sm:$0xff]
  %v13 = vld [vmem:[%s0 + $0x8] sm:$0xff]
  %v14 = vld [vmem:[%s1] sm:$0xff]
  %v15 = vld [vmem:[%s1 + $0x8] sm:$0xff]
  %v16 = vld [vmem:[%s1 + $0x10] sm:$0xff]
  %v17 = vld [vmem:[%s1 + $0x18] sm:$0xff]
  %v18 = vld [vmem:[%s1 + $0x20] sm:$0xff]
  %v19 = vld [vmem:[%s1 + $0x28] sm:$0xff]
  %v20 = vld [vmem:[%s1 + $0x30] sm:$0xff]
  %v21 = vld [vmem:[%s1 + $0x38] sm:$0xff]
  %v22 = vld [vmem:[%s1 + $0x40] sm:$0xff]
  %v23 = vld [vmem:[%s1 + $0x48] sm:$0xff]
  %v24 = vld [vmem:[%s1 + $0x50] sm:$0xf]
  %v25 = vld [vmem:[%s1 + $0x54] sm:$0xff]
  %v26 = vld [vmem:[%s1 + $0x5c] sm:$0xff]
  %v27 = vld [vmem:[%s1 + $0x64] sm:$0xff]
  %v28 = vld [vmem:[%s1 + $0x6c] sm:$0xff]
  %v29 = vld [vmem:[%s1 + $0x74] sm:$0xff]
  %v30 = vld [vmem:[%s1 + $0x7c] sm:$0xff]
  %v31 = vld [vmem:[%s1 + $0x84] sm:$0xff]
  %v32 = vld [vmem:[%s1 + $0x8c] sm:$0xff]
  %v33 = vld [vmem:[%s1 + $0x94] sm:$0xff]
  %v34 = vld [vmem:[%s1 + $0x9c] sm:$0xff]
  %v35 = vld [vmem:[%s1 + $0xa4] sm:$0xf]
  %v36 = vld [vmem:[%s1 + $0xa8] sm:$0xff]
  %v37 = vld [vmem:[%s1 + $0xb0] sm:$0xff]
  %v38 = vld [vmem:[%s1 + $0xb8] sm:$0xff]
  %v39 = vld [vmem:[%s1 + $0xc0] sm:$0xff]
  %v40 = vld [vmem:[%s1 + $0xc8] sm:$0xff]
  %v41 = vld [vmem:[%s1 + $0xd0] sm:$0xff]
  %v42 = vld [vmem:[%s1 + $0xd8] sm:$0xff]
  %v43 = vld [vmem:[%s1 + $0xe0] sm:$0xff]
  %v44 = vld [vmem:[%s1 + $0xe8] sm:$0xff]
  %v45 = vld [vmem:[%s1 + $0xf0] sm:$0xff]
  %v46 = vld [vmem:[%s1 + $0xf8] sm:$0xf]
  %v47 = vld [vmem:[%s1 + $0xfc] sm:$0xff]
  %v48 = vld [vmem:[%s1 + $0x104] sm:$0xff]
  %v49 = vld [vmem:[%s1 + $0x10c] sm:$0xff]
  %v50 = vld [vmem:[%s1 + $0x114] sm:$0xff]
  %v51 = vld [vmem:[%s1 + $0x11c] sm:$0xff]
  %v52 = vld [vmem:[%s1 + $0x124] sm:$0xff]
  %v53 = vld [vmem:[%s1 + $0x12c] sm:$0xff]
  %v54 = vld [vmem:[%s1 + $0x134] sm:$0xff]
  %v55 = vld [vmem:[%s1 + $0x13c] sm:$0xff]
  %v56 = vld [vmem:[%s1 + $0x144] sm:$0xff]
  %v57 = vld [vmem:[%s1 + $0x14c] sm:$0xf]
  %v58 = vld [vmem:[%s1 + $0x150] sm:$0xff]
  %v59 = vld [vmem:[%s1 + $0x158] sm:$0xff]
  %v60 = vld [vmem:[%s1 + $0x160] sm:$0xff]
  %v61 = vld [vmem:[%s1 + $0x168] sm:$0xff]
  %v62 = vld [vmem:[%s1 + $0x170] sm:$0xff]
  %v63 = vld [vmem:[%s1 + $0x178] sm:$0xff]
  %v64 = vld [vmem:[%s1 + $0x180] sm:$0xff]
  %v65 = vld [vmem:[%s1 + $0x188] sm:$0xff]
  %v66 = vld [vmem:[%s1 + $0x190] sm:$0xff]
  %v67 = vld [vmem:[%s1 + $0x198] sm:$0xff]
  %v68 = vld [vmem:[%s1 + $0x1a0] sm:$0xf]
  %v69 = vld [vmem:[%s1 + $0x1a4] sm:$0xff]
  %v70 = vld [vmem:[%s1 + $0x1ac] sm:$0xff]
  %v71 = vld [vmem:[%s1 + $0x1b4] sm:$0xff]
  %v72 = vld [vmem:[%s1 + $0x1bc] sm:$0xff]
  %v73 = vld [vmem:[%s1 + $0x1c4] sm:$0xff]
  %v74 = vld [vmem:[%s1 + $0x1cc] sm:$0xff]
  %v75 = vld [vmem:[%s1 + $0x1d4] sm:$0xff]
  %v76 = vld [vmem:[%s1 + $0x1dc] sm:$0xff]
  %v77 = vld [vmem:[%s1 + $0x1e4] sm:$0xff]
  %v78 = vld [vmem:[%s1 + $0x1ec] sm:$0xff]
  %v79 = vld [vmem:[%s1 + $0x1f4] sm:$0xf]
  %v80 = vld [vmem:[%s1 + $0x1f8] sm:$0xff]
  %v81 = vld [vmem:[%s1 + $0x200] sm:$0xff]
  %v82 = vld [vmem:[%s1 + $0x208] sm:$0xff]
  %v83 = vld [vmem:[%s1 + $0x210] sm:$0xff]
  %v84 = vld [vmem:[%s1 + $0x218] sm:$0xff]
  %v85 = vld [vmem:[%s1 + $0x220] sm:$0xff]
  %v86 = vld [vmem:[%s1 + $0x228] sm:$0xff]
  %v87 = vld [vmem:[%s1 + $0x230] sm:$0xff]
  %v88 = vld [vmem:[%s1 + $0x238] sm:$0xff]
  %v89 = vld [vmem:[%s1 + $0x240] sm:$0xff]
  %v90 = vld [vmem:[%s1 + $0x248] sm:$0xf]
  %v91 = vld [vmem:[%s1 + $0x24c] sm:$0xff]
  %v92 = vld [vmem:[%s1 + $0x254] sm:$0xff]
  %v93 = vld [vmem:[%s1 + $0x25c] sm:$0xff]
  %v94 = vld [vmem:[%s1 + $0x264] sm:$0xff]
  %v95 = vld [vmem:[%s1 + $0x26c] sm:$0xff]
  %v96 = vld [vmem:[%s1 + $0x274] sm:$0xff]
  %v97 = vld [vmem:[%s1 + $0x27c] sm:$0xff]
  %v98 = vld [vmem:[%s1 + $0x284] sm:$0xff]
  %v99 = vld [vmem:[%s1 + $0x28c] sm:$0xff]
  %v100 = vld [vmem:[%s1 + $0x294] sm:$0xff]
  %v101 = vld [vmem:[%s1 + $0x29c] sm:$0xf]
  %v102 = vld [vmem:[%s1 + $0x2a0] sm:$0xff]
  %v103 = vld [vmem:[%s1 + $0x2a8] sm:$0xff]
  %v104 = vld [vmem:[%s1 + $0x2b0] sm:$0xff]
  %v105 = vld [vmem:[%s1 + $0x2b8] sm:$0xff]
  %v106 = vld [vmem:[%s1 + $0x2c0] sm:$0xff]
  %v107 = vld [vmem:[%s1 + $0x2c8] sm:$0xff]
  %v108 = vld [vmem:[%s1 + $0x2d0] sm:$0xff]
  %v109 = vld [vmem:[%s1 + $0x2d8] sm:$0xff]
  %v110 = vld [vmem:[%s1 + $0x2e0] sm:$0xff]
  %v111 = vld [vmem:[%s1 + $0x2e8] sm:$0xff]
  %v112 = vld [vmem:[%s1 + $0x2f0] sm:$0xf]
  %v113 = vld [vmem:[%s1 + $0x2f4] sm:$0xff]
  %v114 = vld [vmem:[%s1 + $0x2fc] sm:$0xff]
  %v115 = vld [vmem:[%s1 + $0x304] sm:$0xff]
  %v116 = vld [vmem:[%s1 + $0x30c] sm:$0xff]
  %v117 = vld [vmem:[%s1 + $0x314] sm:$0xff]
  %v118 = vld [vmem:[%s1 + $0x31c] sm:$0xff]
  %v119 = vld [vmem:[%s1 + $0x324] sm:$0xff]
  %v120 = vld [vmem:[%s1 + $0x32c] sm:$0xff]
  %v121 = vld [vmem:[%s1 + $0x334] sm:$0xff]
  %v122 = vld [vmem:[%s1 + $0x33c] sm:$0xff]
  %v123 = vld [vmem:[%s1 + $0x344] sm:$0xf]
  %v124 = vld [vmem:[%s1 + $0x348] sm:$0xff]
  %v125 = vld [vmem:[%s1 + $0x350] sm:$0xff]
  %v126 = vld [vmem:[%s1 + $0x358] sm:$0xff]
  %v127 = vld [vmem:[%s1 + $0x360] sm:$0xff]
  %v128 = vld [vmem:[%s1 + $0x368] sm:$0xff]
  %v129 = vld [vmem:[%s1 + $0x370] sm:$0xff]
  %v130 = vld [vmem:[%s1 + $0x378] sm:$0xff]
  %v131 = vld [vmem:[%s1 + $0x380] sm:$0xff]
  %v132 = vld [vmem:[%s1 + $0x388] sm:$0xff]
  %v133 = vld [vmem:[%s1 + $0x390] sm:$0xff]
  %v134 = vld [vmem:[%s1 + $0x398] sm:$0xf]
  %v135 = vld [vmem:[%s1 + $0x39c] sm:$0xff]
  %v136 = vld [vmem:[%s1 + $0x3a4] sm:$0xff]
  %v137 = vld [vmem:[%s1 + $0x3ac] sm:$0xff]
  %v138 = vld [vmem:[%s1 + $0x3b4] sm:$0xff]
  %v139 = vld [vmem:[%s1 + $0x3bc] sm:$0xff]
  %v140 = vld [vmem:[%s1 + $0x3c4] sm:$0xff]
  %v141 = vld [vmem:[%s1 + $0x3cc] sm:$0xff]
  %v142 = vld [vmem:[%s1 + $0x3d4] sm:$0xff]
  %v143 = vld [vmem:[%s1 + $0x3dc] sm:$0xff]
  %v144 = vld [vmem:[%s1 + $0x3e4] sm:$0xff]
  %v145 = vld [vmem:[%s1 + $0x3ec] sm:$0xf]
  %v146 = vld [vmem:[%s1 + $0x3f0] sm:$0xff]
  %v147 = vld [vmem:[%s1 + $0x3f8] sm:$0xff]
  %v148 = vld [vmem:[%s1 + $0x400] sm:$0xff]
  %v149 = vld [vmem:[%s1 + $0x408] sm:$0xff]
  %v150 = vld [vmem:[%s1 + $0x410] sm:$0xff]
  %v151 = vld [vmem:[%s1 + $0x418] sm:$0xff]
  %v152 = vld [vmem:[%s1 + $0x420] sm:$0xff]
  %v153 = vld [vmem:[%s1 + $0x428] sm:$0xff]
  %v154 = vld [vmem:[%s1 + $0x430] sm:$0xff]
  %v155 = vld [vmem:[%s1 + $0x438] sm:$0xff]
  %v156 = vld [vmem:[%s1 + $0x440] sm:$0xf]
  %v157 = vld [vmem:[%s1 + $0x444] sm:$0xff]
  %v158 = vld [vmem:[%s1 + $0x44c] sm:$0xff]
  %v159 = vld [vmem:[%s1 + $0x454] sm:$0xff]
  %v160 = vld [vmem:[%s1 + $0x45c] sm:$0xff]
  %v161 = vld [vmem:[%s1 + $0x464] sm:$0xff]
  %v162 = vld [vmem:[%s1 + $0x46c] sm:$0xff]
  %v163 = vld [vmem:[%s1 + $0x474] sm:$0xff]
  %v164 = vld [vmem:[%s1 + $0x47c] sm:$0xff]
  %v165 = vld [vmem:[%s1 + $0x484] sm:$0xff]
  %v166 = vld [vmem:[%s1 + $0x48c] sm:$0xff]
  %v167 = vld [vmem:[%s1 + $0x494] sm:$0xf]
  %v168 = vld [vmem:[%s1 + $0x498] sm:$0xff]
  %v169 = vld [vmem:[%s1 + $0x4a0] sm:$0xff]
  %v170 = vld [vmem:[%s1 + $0x4a8] sm:$0xff]
  %v171 = vld [vmem:[%s1 + $0x4b0] sm:$0xff]
  %v172 = vld [vmem:[%s1 + $0x4b8] sm:$0xff]
  %v173 = vld [vmem:[%s1 + $0x4c0] sm:$0xff]
  %v174 = vld [vmem:[%s1 + $0x4c8] sm:$0xff]
  %v175 = vld [vmem:[%s1 + $0x4d0] sm:$0xff]
  %v176 = vld [vmem:[%s1 + $0x4d8] sm:$0xff]
  %v177 = vld [vmem:[%s1 + $0x4e0] sm:$0xff]
  %v178 = vld [vmem:[%s1 + $0x4e8] sm:$0xf]
  %v179 = vld [vmem:[%s1 + $0x4ec] sm:$0xff]
  %v180 = vld [vmem:[%s1 + $0x4f4] sm:$0xff]
  %v181 = vld [vmem:[%s1 + $0x4fc] sm:$0xff]
  %v182 = vld [vmem:[%s1 + $0x504] sm:$0xff]
  %v183 = vld [vmem:[%s1 + $0x50c] sm:$0xff]
  %v184 = vld [vmem:[%s1 + $0x514] sm:$0xff]
  %v185 = vld [vmem:[%s1 + $0x51c] sm:$0xff]
  %v186 = vld [vmem:[%s1 + $0x524] sm:$0xff]
  %v187 = vld [vmem:[%s1 + $0x52c] sm:$0xff]
  %v188 = vld [vmem:[%s1 + $0x534] sm:$0xff]
  %v189 = vld [vmem:[%s1 + $0x53c] sm:$0xf]
  %v190 = vld [vmem:[%s1 + $0x540] sm:$0xff]
  %v191 = vld [vmem:[%s1 + $0x548] sm:$0xff]
  %v192 = vld [vmem:[%s1 + $0x550] sm:$0xff]
  %v193 = vld [vmem:[%s1 + $0x558] sm:$0xff]
  %v194 = vld [vmem:[%s1 + $0x560] sm:$0xff]
  %v195 = vld [vmem:[%s1 + $0x568] sm:$0xff]
  %v196 = vld [vmem:[%s1 + $0x570] sm:$0xff]
  %v197 = vld [vmem:[%s1 + $0x578] sm:$0xff]
  %v198 = vld [vmem:[%s1 + $0x580] sm:$0xff]
  %v199 = vld [vmem:[%s1 + $0x588] sm:$0xff]
  %v200 = vld [vmem:[%s1 + $0x590] sm:$0xf]
  %v201 = vld [vmem:[%s1 + $0x594] sm:$0xff]
  %v202 = vld [vmem:[%s1 + $0x59c] sm:$0xff]
  %v203 = vld [vmem:[%s1 + $0x5a4] sm:$0xff]
  %v204 = vld [vmem:[%s1 + $0x5ac] sm:$0xff]
  %v205 = vld [vmem:[%s1 + $0x5b4] sm:$0xff]
  %v206 = vld [vmem:[%s1 + $0x5bc] sm:$0xff]
  %v207 = vld [vmem:[%s1 + $0x5c4] sm:$0xff]
  %v208 = vld [vmem:[%s1 + $0x5cc] sm:$0xff]
  %v209 = vld [vmem:[%s1 + $0x5d4] sm:$0xff]
  %v210 = vld [vmem:[%s1 + $0x5dc] sm:$0xff]
  %v211 = vld [vmem:[%s1 + $0x5e4] sm:$0xf]
  %v212 = vld [vmem:[%s1 + $0x5e8] sm:$0xff]
  %v213 = vld [vmem:[%s1 + $0x5f0] sm:$0xff]
  %v214 = vld [vmem:[%s1 + $0x5f8] sm:$0xff]
  %v215 = vld [vmem:[%s1 + $0x600] sm:$0xff]
  %v216 = vld [vmem:[%s1 + $0x608] sm:$0xff]
  %v217 = vld [vmem:[%s1 + $0x610] sm:$0xff]
  %v218 = vld [vmem:[%s1 + $0x618] sm:$0xff]
  %v219 = vld [vmem:[%s1 + $0x620] sm:$0xff]
  %v220 = vld [vmem:[%s1 + $0x628] sm:$0xff]
  %v221 = vld [vmem:[%s1 + $0x630] sm:$0xff]
  %v222 = vld [vmem:[%s1 + $0x638] sm:$0xf]
  %v223 = vld [vmem:[%s1 + $0x63c] sm:$0xff]
  %v224 = vld [vmem:[%s1 + $0x644] sm:$0xff]
  %v225 = vld [vmem:[%s1 + $0x64c] sm:$0xff]
  %v226 = vld [vmem:[%s1 + $0x654] sm:$0xff]
  %v227 = vld [vmem:[%s1 + $0x65c] sm:$0xff]
  %v228 = vld [vmem:[%s1 + $0x664] sm:$0xff]
  %v229 = vld [vmem:[%s1 + $0x66c] sm:$0xff]
  %v230 = vld [vmem:[%s1 + $0x674] sm:$0xff]
  %v231 = vld [vmem:[%s1 + $0x67c] sm:$0xff]
  %v232 = vld [vmem:[%s1 + $0x684] sm:$0xff]
  %v233 = vld [vmem:[%s1 + $0x68c] sm:$0xf]
  %v236 = vunpack.c.l.b16 %v12
  %v237 = vunpack.c.h.b16 %v12
  %v238 = vunpack.c.l.b16 %v13
  %v239 = vunpack.c.h.b16 %v13
  %v240 = vpack.c.b16 %v238, %v236
  %v241 = vpack.c.b16 %v239, %v237
  %v463 = vunpack.c.l.b16 %v14
  %v464 = vunpack.c.h.b16 %v14
  %v465 = vunpack.c.l.b16 %v15
  %v466 = vunpack.c.h.b16 %v15
  %v467 = vunpack.c.l.b16 %v16
  %v468 = vunpack.c.h.b16 %v16
  %v469 = vunpack.c.l.b16 %v17
  %v470 = vunpack.c.h.b16 %v17
  %v471 = vunpack.c.l.b16 %v18
  %v472 = vunpack.c.h.b16 %v18
  %v473 = vunpack.c.l.b16 %v19
  %v474 = vunpack.c.h.b16 %v19
  %v475 = vunpack.c.l.b16 %v20
  %v476 = vunpack.c.h.b16 %v20
  %v477 = vunpack.c.l.b16 %v21
  %v478 = vunpack.c.h.b16 %v21
  %v479 = vunpack.c.l.b16 %v22
  %v480 = vunpack.c.h.b16 %v22
  %v481 = vunpack.c.l.b16 %v23
  %v482 = vunpack.c.h.b16 %v23
  %v483 = vunpack.c.l.b16 %v24
  %v484 = vunpack.c.l.b16 %v25
  %v485 = vunpack.c.h.b16 %v25
  %v486 = vunpack.c.l.b16 %v26
  %v487 = vunpack.c.h.b16 %v26
  %v488 = vunpack.c.l.b16 %v27
  %v489 = vunpack.c.h.b16 %v27
  %v490 = vunpack.c.l.b16 %v28
  %v491 = vunpack.c.h.b16 %v28
  %v492 = vunpack.c.l.b16 %v29
  %v493 = vunpack.c.h.b16 %v29
  %v494 = vunpack.c.l.b16 %v30
  %v495 = vunpack.c.h.b16 %v30
  %v496 = vunpack.c.l.b16 %v31
  %v497 = vunpack.c.h.b16 %v31
  %v498 = vunpack.c.l.b16 %v32
  %v499 = vunpack.c.h.b16 %v32
  %v500 = vunpack.c.l.b16 %v33
  %v501 = vunpack.c.h.b16 %v33
  %v502 = vunpack.c.l.b16 %v34
  %v503 = vunpack.c.h.b16 %v34
  %v504 = vunpack.c.l.b16 %v35
  %v505 = vunpack.c.l.b16 %v36
  %v506 = vunpack.c.h.b16 %v36
  %v507 = vunpack.c.l.b16 %v37
  %v508 = vunpack.c.h.b16 %v37
  %v509 = vunpack.c.l.b16 %v38
  %v510 = vunpack.c.h.b16 %v38
  %v511 = vunpack.c.l.b16 %v39
  %v512 = vunpack.c.h.b16 %v39
  %v513 = vunpack.c.l.b16 %v40
  %v514 = vunpack.c.h.b16 %v40
  %v515 = vunpack.c.l.b16 %v41
  %v516 = vunpack.c.h.b16 %v41
  %v517 = vunpack.c.l.b16 %v42
  %v518 = vunpack.c.h.b16 %v42
  %v519 = vunpack.c.l.b16 %v43
  %v520 = vunpack.c.h.b16 %v43
  %v521 = vunpack.c.l.b16 %v44
  %v522 = vunpack.c.h.b16 %v44
  %v523 = vunpack.c.l.b16 %v45
  %v524 = vunpack.c.h.b16 %v45
  %v525 = vunpack.c.l.b16 %v46
  %v526 = vunpack.c.l.b16 %v47
  %v527 = vunpack.c.h.b16 %v47
  %v528 = vunpack.c.l.b16 %v48
  %v529 = vunpack.c.h.b16 %v48
  %v530 = vunpack.c.l.b16 %v49
  %v531 = vunpack.c.h.b16 %v49
  %v532 = vunpack.c.l.b16 %v50
  %v533 = vunpack.c.h.b16 %v50
  %v534 = vunpack.c.l.b16 %v51
  %v535 = vunpack.c.h.b16 %v51
  %v536 = vunpack.c.l.b16 %v52
  %v537 = vunpack.c.h.b16 %v52
  %v538 = vunpack.c.l.b16 %v53
  %v539 = vunpack.c.h.b16 %v53
  %v540 = vunpack.c.l.b16 %v54
  %v541 = vunpack.c.h.b16 %v54
  %v542 = vunpack.c.l.b16 %v55
  %v543 = vunpack.c.h.b16 %v55
  %v544 = vunpack.c.l.b16 %v56
  %v545 = vunpack.c.h.b16 %v56
  %v546 = vunpack.c.l.b16 %v57
  %v547 = vunpack.c.l.b16 %v58
  %v548 = vunpack.c.h.b16 %v58
  %v549 = vunpack.c.l.b16 %v59
  %v550 = vunpack.c.h.b16 %v59
  %v551 = vunpack.c.l.b16 %v60
  %v552 = vunpack.c.h.b16 %v60
  %v553 = vunpack.c.l.b16 %v61
  %v554 = vunpack.c.h.b16 %v61
  %v555 = vunpack.c.l.b16 %v62
  %v556 = vunpack.c.h.b16 %v62
  %v557 = vunpack.c.l.b16 %v63
  %v558 = vunpack.c.h.b16 %v63
  %v559 = vunpack.c.l.b16 %v64
  %v560 = vunpack.c.h.b16 %v64
  %v561 = vunpack.c.l.b16 %v65
  %v562 = vunpack.c.h.b16 %v65
  %v563 = vunpack.c.l.b16 %v66
  %v564 = vunpack.c.h.b16 %v66
  %v565 = vunpack.c.l.b16 %v67
  %v566 = vunpack.c.h.b16 %v67
  %v567 = vunpack.c.l.b16 %v68
  %v568 = vunpack.c.l.b16 %v69
  %v569 = vunpack.c.h.b16 %v69
  %v570 = vunpack.c.l.b16 %v70
  %v571 = vunpack.c.h.b16 %v70
  %v572 = vunpack.c.l.b16 %v71
  %v573 = vunpack.c.h.b16 %v71
  %v574 = vunpack.c.l.b16 %v72
  %v575 = vunpack.c.h.b16 %v72
  %v576 = vunpack.c.l.b16 %v73
  %v577 = vunpack.c.h.b16 %v73
  %v578 = vunpack.c.l.b16 %v74
  %v579 = vunpack.c.h.b16 %v74
  %v580 = vunpack.c.l.b16 %v75
  %v581 = vunpack.c.h.b16 %v75
  %v582 = vunpack.c.l.b16 %v76
  %v583 = vunpack.c.h.b16 %v76
  %v584 = vunpack.c.l.b16 %v77
  %v585 = vunpack.c.h.b16 %v77
  %v586 = vunpack.c.l.b16 %v78
  %v587 = vunpack.c.h.b16 %v78
  %v588 = vunpack.c.l.b16 %v79
  %v589 = vunpack.c.l.b16 %v80
  %v590 = vunpack.c.h.b16 %v80
  %v591 = vunpack.c.l.b16 %v81
  %v592 = vunpack.c.h.b16 %v81
  %v593 = vunpack.c.l.b16 %v82
  %v594 = vunpack.c.h.b16 %v82
  %v595 = vunpack.c.l.b16 %v83
  %v596 = vunpack.c.h.b16 %v83
  %v597 = vunpack.c.l.b16 %v84
  %v598 = vunpack.c.h.b16 %v84
  %v599 = vunpack.c.l.b16 %v85
  %v600 = vunpack.c.h.b16 %v85
  %v601 = vunpack.c.l.b16 %v86
  %v602 = vunpack.c.h.b16 %v86
  %v603 = vunpack.c.l.b16 %v87
  %v604 = vunpack.c.h.b16 %v87
  %v605 = vunpack.c.l.b16 %v88
  %v606 = vunpack.c.h.b16 %v88
  %v607 = vunpack.c.l.b16 %v89
  %v608 = vunpack.c.h.b16 %v89
  %v609 = vunpack.c.l.b16 %v90
  %v610 = vunpack.c.l.b16 %v91
  %v611 = vunpack.c.h.b16 %v91
  %v612 = vunpack.c.l.b16 %v92
  %v613 = vunpack.c.h.b16 %v92
  %v614 = vunpack.c.l.b16 %v93
  %v615 = vunpack.c.h.b16 %v93
  %v616 = vunpack.c.l.b16 %v94
  %v617 = vunpack.c.h.b16 %v94
  %v618 = vunpack.c.l.b16 %v95
  %v619 = vunpack.c.h.b16 %v95
  %v620 = vunpack.c.l.b16 %v96
  %v621 = vunpack.c.h.b16 %v96
  %v622 = vunpack.c.l.b16 %v97
  %v623 = vunpack.c.h.b16 %v97
  %v624 = vunpack.c.l.b16 %v98
  %v625 = vunpack.c.h.b16 %v98
  %v626 = vunpack.c.l.b16 %v99
  %v627 = vunpack.c.h.b16 %v99
  %v628 = vunpack.c.l.b16 %v100
  %v629 = vunpack.c.h.b16 %v100
  %v630 = vunpack.c.l.b16 %v101
  %v631 = vunpack.c.l.b16 %v102
  %v632 = vunpack.c.h.b16 %v102
  %v633 = vunpack.c.l.b16 %v103
  %v634 = vunpack.c.h.b16 %v103
  %v635 = vunpack.c.l.b16 %v104
  %v636 = vunpack.c.h.b16 %v104
  %v637 = vunpack.c.l.b16 %v105
  %v638 = vunpack.c.h.b16 %v105
  %v639 = vunpack.c.l.b16 %v106
  %v640 = vunpack.c.h.b16 %v106
  %v641 = vunpack.c.l.b16 %v107
  %v642 = vunpack.c.h.b16 %v107
  %v643 = vunpack.c.l.b16 %v108
  %v644 = vunpack.c.h.b16 %v108
  %v645 = vunpack.c.l.b16 %v109
  %v646 = vunpack.c.h.b16 %v109
  %v647 = vunpack.c.l.b16 %v110
  %v648 = vunpack.c.h.b16 %v110
  %v649 = vunpack.c.l.b16 %v111
  %v650 = vunpack.c.h.b16 %v111
  %v651 = vunpack.c.l.b16 %v112
  %v652 = vunpack.c.l.b16 %v113
  %v653 = vunpack.c.h.b16 %v113
  %v654 = vunpack.c.l.b16 %v114
  %v655 = vunpack.c.h.b16 %v114
  %v656 = vunpack.c.l.b16 %v115
  %v657 = vunpack.c.h.b16 %v115
  %v658 = vunpack.c.l.b16 %v116
  %v659 = vunpack.c.h.b16 %v116
  %v660 = vunpack.c.l.b16 %v117
  %v661 = vunpack.c.h.b16 %v117
  %v662 = vunpack.c.l.b16 %v118
  %v663 = vunpack.c.h.b16 %v118
  %v664 = vunpack.c.l.b16 %v119
  %v665 = vunpack.c.h.b16 %v119
  %v666 = vunpack.c.l.b16 %v120
  %v667 = vunpack.c.h.b16 %v120
  %v668 = vunpack.c.l.b16 %v121
  %v669 = vunpack.c.h.b16 %v121
  %v670 = vunpack.c.l.b16 %v122
  %v671 = vunpack.c.h.b16 %v122
  %v672 = vunpack.c.l.b16 %v123
  %v673 = vunpack.c.l.b16 %v124
  %v674 = vunpack.c.h.b16 %v124
  %v675 = vunpack.c.l.b16 %v125
  %v676 = vunpack.c.h.b16 %v125
  %v677 = vunpack.c.l.b16 %v126
  %v678 = vunpack.c.h.b16 %v126
  %v679 = vunpack.c.l.b16 %v127
  %v680 = vunpack.c.h.b16 %v127
  %v681 = vunpack.c.l.b16 %v128
  %v682 = vunpack.c.h.b16 %v128
  %v683 = vunpack.c.l.b16 %v129
  %v684 = vunpack.c.h.b16 %v129
  %v685 = vunpack.c.l.b16 %v130
  %v686 = vunpack.c.h.b16 %v130
  %v687 = vunpack.c.l.b16 %v131
  %v688 = vunpack.c.h.b16 %v131
  %v689 = vunpack.c.l.b16 %v132
  %v690 = vunpack.c.h.b16 %v132
  %v691 = vunpack.c.l.b16 %v133
  %v692 = vunpack.c.h.b16 %v133
  %v693 = vunpack.c.l.b16 %v134
  %v694 = vunpack.c.l.b16 %v135
  %v695 = vunpack.c.h.b16 %v135
  %v696 = vunpack.c.l.b16 %v136
  %v697 = vunpack.c.h.b16 %v136
  %v698 = vunpack.c.l.b16 %v137
  %v699 = vunpack.c.h.b16 %v137
  %v700 = vunpack.c.l.b16 %v138
  %v701 = vunpack.c.h.b16 %v138
  %v702 = vunpack.c.l.b16 %v139
  %v703 = vunpack.c.h.b16 %v139
  %v704 = vunpack.c.l.b16 %v140
  %v705 = vunpack.c.h.b16 %v140
  %v706 = vunpack.c.l.b16 %v141
  %v707 = vunpack.c.h.b16 %v141
  %v708 = vunpack.c.l.b16 %v142
  %v709 = vunpack.c.h.b16 %v142
  %v710 = vunpack.c.l.b16 %v143
  %v711 = vunpack.c.h.b16 %v143
  %v712 = vunpack.c.l.b16 %v144
  %v713 = vunpack.c.h.b16 %v144
  %v714 = vunpack.c.l.b16 %v145
  %v715 = vunpack.c.l.b16 %v146
  %v716 = vunpack.c.h.b16 %v146
  %v717 = vunpack.c.l.b16 %v147
  %v718 = vunpack.c.h.b16 %v147
  %v719 = vunpack.c.l.b16 %v148
  %v720 = vunpack.c.h.b16 %v148
  %v721 = vunpack.c.l.b16 %v149
  %v722 = vunpack.c.h.b16 %v149
  %v723 = vunpack.c.l.b16 %v150
  %v724 = vunpack.c.h.b16 %v150
  %v725 = vunpack.c.l.b16 %v151
  %v726 = vunpack.c.h.b16 %v151
  %v727 = vunpack.c.l.b16 %v152
  %v728 = vunpack.c.h.b16 %v152
  %v729 = vunpack.c.l.b16 %v153
  %v730 = vunpack.c.h.b16 %v153
  %v731 = vunpack.c.l.b16 %v154
  %v732 = vunpack.c.h.b16 %v154
  %v733 = vunpack.c.l.b16 %v155
  %v734 = vunpack.c.h.b16 %v155
  %v735 = vunpack.c.l.b16 %v156
  %v736 = vunpack.c.l.b16 %v157
  %v737 = vunpack.c.h.b16 %v157
  %v738 = vunpack.c.l.b16 %v158
  %v739 = vunpack.c.h.b16 %v158
  %v740 = vunpack.c.l.b16 %v159
  %v741 = vunpack.c.h.b16 %v159
  %v742 = vunpack.c.l.b16 %v160
  %v743 = vunpack.c.h.b16 %v160
  %v744 = vunpack.c.l.b16 %v161
  %v745 = vunpack.c.h.b16 %v161
  %v746 = vunpack.c.l.b16 %v162
  %v747 = vunpack.c.h.b16 %v162
  %v748 = vunpack.c.l.b16 %v163
  %v749 = vunpack.c.h.b16 %v163
  %v750 = vunpack.c.l.b16 %v164
  %v751 = vunpack.c.h.b16 %v164
  %v752 = vunpack.c.l.b16 %v165
  %v753 = vunpack.c.h.b16 %v165
  %v754 = vunpack.c.l.b16 %v166
  %v755 = vunpack.c.h.b16 %v166
  %v756 = vunpack.c.l.b16 %v167
  %v757 = vunpack.c.l.b16 %v168
  %v758 = vunpack.c.h.b16 %v168
  %v759 = vunpack.c.l.b16 %v169
  %v760 = vunpack.c.h.b16 %v169
  %v761 = vunpack.c.l.b16 %v170
  %v762 = vunpack.c.h.b16 %v170
  %v763 = vunpack.c.l.b16 %v171
  %v764 = vunpack.c.h.b16 %v171
  %v765 = vunpack.c.l.b16 %v172
  %v766 = vunpack.c.h.b16 %v172
  %v767 = vunpack.c.l.b16 %v173
  %v768 = vunpack.c.h.b16 %v173
  %v769 = vunpack.c.l.b16 %v174
  %v770 = vunpack.c.h.b16 %v174
  %v771 = vunpack.c.l.b16 %v175
  %v772 = vunpack.c.h.b16 %v175
  %v773 = vunpack.c.l.b16 %v176
  %v774 = vunpack.c.h.b16 %v176
  %v775 = vunpack.c.l.b16 %v177
  %v776 = vunpack.c.h.b16 %v177
  %v777 = vunpack.c.l.b16 %v178
  %v778 = vunpack.c.l.b16 %v179
  %v779 = vunpack.c.h.b16 %v179
  %v780 = vunpack.c.l.b16 %v180
  %v781 = vunpack.c.h.b16 %v180
  %v782 = vunpack.c.l.b16 %v181
  %v783 = vunpack.c.h.b16 %v181
  %v784 = vunpack.c.l.b16 %v182
  %v785 = vunpack.c.h.b16 %v182
  %v786 = vunpack.c.l.b16 %v183
  %v787 = vunpack.c.h.b16 %v183
  %v788 = vunpack.c.l.b16 %v184
  %v789 = vunpack.c.h.b16 %v184
  %v790 = vunpack.c.l.b16 %v185
  %v791 = vunpack.c.h.b16 %v185
  %v792 = vunpack.c.l.b16 %v186
  %v793 = vunpack.c.h.b16 %v186
  %v794 = vunpack.c.l.b16 %v187
  %v795 = vunpack.c.h.b16 %v187
  %v796 = vunpack.c.l.b16 %v188
  %v797 = vunpack.c.h.b16 %v188
  %v798 = vunpack.c.l.b16 %v189
  %v799 = vunpack.c.l.b16 %v190
  %v800 = vunpack.c.h.b16 %v190
  %v801 = vunpack.c.l.b16 %v191
  %v802 = vunpack.c.h.b16 %v191
  %v803 = vunpack.c.l.b16 %v192
  %v804 = vunpack.c.h.b16 %v192
  %v805 = vunpack.c.l.b16 %v193
  %v806 = vunpack.c.h.b16 %v193
  %v807 = vunpack.c.l.b16 %v194
  %v808 = vunpack.c.h.b16 %v194
  %v809 = vunpack.c.l.b16 %v195
  %v810 = vunpack.c.h.b16 %v195
  %v811 = vunpack.c.l.b16 %v196
  %v812 = vunpack.c.h.b16 %v196
  %v813 = vunpack.c.l.b16 %v197
  %v814 = vunpack.c.h.b16 %v197
  %v815 = vunpack.c.l.b16 %v198
  %v816 = vunpack.c.h.b16 %v198
  %v817 = vunpack.c.l.b16 %v199
  %v818 = vunpack.c.h.b16 %v199
  %v819 = vunpack.c.l.b16 %v200
  %v820 = vunpack.c.l.b16 %v201
  %v821 = vunpack.c.h.b16 %v201
  %v822 = vunpack.c.l.b16 %v202
  %v823 = vunpack.c.h.b16 %v202
  %v824 = vunpack.c.l.b16 %v203
  %v825 = vunpack.c.h.b16 %v203
  %v826 = vunpack.c.l.b16 %v204
  %v827 = vunpack.c.h.b16 %v204
  %v828 = vunpack.c.l.b16 %v205
  %v829 = vunpack.c.h.b16 %v205
  %v830 = vunpack.c.l.b16 %v206
  %v831 = vunpack.c.h.b16 %v206
  %v832 = vunpack.c.l.b16 %v207
  %v833 = vunpack.c.h.b16 %v207
  %v834 = vunpack.c.l.b16 %v208
  %v835 = vunpack.c.h.b16 %v208
  %v836 = vunpack.c.l.b16 %v209
  %v837 = vunpack.c.h.b16 %v209
  %v838 = vunpack.c.l.b16 %v210
  %v839 = vunpack.c.h.b16 %v210
  %v840 = vunpack.c.l.b16 %v211
  %v841 = vunpack.c.l.b16 %v212
  %v842 = vunpack.c.h.b16 %v212
  %v843 = vunpack.c.l.b16 %v213
  %v844 = vunpack.c.h.b16 %v213
  %v845 = vunpack.c.l.b16 %v214
  %v846 = vunpack.c.h.b16 %v214
  %v847 = vunpack.c.l.b16 %v215
  %v848 = vunpack.c.h.b16 %v215
  %v849 = vunpack.c.l.b16 %v216
  %v850 = vunpack.c.h.b16 %v216
  %v851 = vunpack.c.l.b16 %v217
  %v852 = vunpack.c.h.b16 %v217
  %v853 = vunpack.c.l.b16 %v218
  %v854 = vunpack.c.h.b16 %v218
  %v855 = vunpack.c.l.b16 %v219
  %v856 = vunpack.c.h.b16 %v219
  %v857 = vunpack.c.l.b16 %v220
  %v858 = vunpack.c.h.b16 %v220
  %v859 = vunpack.c.l.b16 %v221
  %v860 = vunpack.c.h.b16 %v221
  %v861 = vunpack.c.l.b16 %v222
  %v862 = vunpack.c.l.b16 %v223
  %v863 = vunpack.c.h.b16 %v223
  %v864 = vunpack.c.l.b16 %v224
  %v865 = vunpack.c.h.b16 %v224
  %v866 = vunpack.c.l.b16 %v225
  %v867 = vunpack.c.h.b16 %v225
  %v868 = vunpack.c.l.b16 %v226
  %v869 = vunpack.c.h.b16 %v226
  %v870 = vunpack.c.l.b16 %v227
  %v871 = vunpack.c.h.b16 %v227
  %v872 = vunpack.c.l.b16 %v228
  %v873 = vunpack.c.h.b16 %v228
  %v874 = vunpack.c.l.b16 %v229
  %v875 = vunpack.c.h.b16 %v229
  %v876 = vunpack.c.l.b16 %v230
  %v877 = vunpack.c.h.b16 %v230
  %v878 = vunpack.c.l.b16 %v231
  %v879 = vunpack.c.h.b16 %v231
  %v880 = vunpack.c.l.b16 %v232
  %v881 = vunpack.c.h.b16 %v232
  %v882 = vunpack.c.l.b16 %v233
  %v883 = vpack.c.b16 %v484, %v463
  %v884 = vpack.c.b16 %v485, %v464
  %v885 = vpack.c.b16 %v486, %v465
  %v886 = vpack.c.b16 %v487, %v466
  %v887 = vpack.c.b16 %v488, %v467
  %v888 = vpack.c.b16 %v489, %v468
  %v889 = vpack.c.b16 %v490, %v469
  %v890 = vpack.c.b16 %v491, %v470
  %v891 = vpack.c.b16 %v492, %v471
  %v892 = vpack.c.b16 %v493, %v472
  %v893 = vpack.c.b16 %v494, %v473
  %v894 = vpack.c.b16 %v495, %v474
  %v895 = vpack.c.b16 %v496, %v475
  %v896 = vpack.c.b16 %v497, %v476
  %v897 = vpack.c.b16 %v498, %v477
  %v898 = vpack.c.b16 %v499, %v478
  %v899 = vpack.c.b16 %v500, %v479
  %v900 = vpack.c.b16 %v501, %v480
  %v901 = vpack.c.b16 %v502, %v481
  %v902 = vpack.c.b16 %v503, %v482
  %v903 = vpack.c.b16 %v504, %v483
  %v904 = vpack.c.b16 %v526, %v505
  %v905 = vpack.c.b16 %v527, %v506
  %v906 = vpack.c.b16 %v528, %v507
  %v907 = vpack.c.b16 %v529, %v508
  %v908 = vpack.c.b16 %v530, %v509
  %v909 = vpack.c.b16 %v531, %v510
  %v910 = vpack.c.b16 %v532, %v511
  %v911 = vpack.c.b16 %v533, %v512
  %v912 = vpack.c.b16 %v534, %v513
  %v913 = vpack.c.b16 %v535, %v514
  %v914 = vpack.c.b16 %v536, %v515
  %v915 = vpack.c.b16 %v537, %v516
  %v916 = vpack.c.b16 %v538, %v517
  %v917 = vpack.c.b16 %v539, %v518
  %v918 = vpack.c.b16 %v540, %v519
  %v919 = vpack.c.b16 %v541, %v520
  %v920 = vpack.c.b16 %v542, %v521
  %v921 = vpack.c.b16 %v543, %v522
  %v922 = vpack.c.b16 %v544, %v523
  %v923 = vpack.c.b16 %v545, %v524
  %v924 = vpack.c.b16 %v546, %v525
  %v925 = vpack.c.b16 %v568, %v547
  %v926 = vpack.c.b16 %v569, %v548
  %v927 = vpack.c.b16 %v570, %v549
  %v928 = vpack.c.b16 %v571, %v550
  %v929 = vpack.c.b16 %v572, %v551
  %v930 = vpack.c.b16 %v573, %v552
  %v931 = vpack.c.b16 %v574, %v553
  %v932 = vpack.c.b16 %v575, %v554
  %v933 = vpack.c.b16 %v576, %v555
  %v934 = vpack.c.b16 %v577, %v556
  %v935 = vpack.c.b16 %v578, %v557
  %v936 = vpack.c.b16 %v579, %v558
  %v937 = vpack.c.b16 %v580, %v559
  %v938 = vpack.c.b16 %v581, %v560
  %v939 = vpack.c.b16 %v582, %v561
  %v940 = vpack.c.b16 %v583, %v562
  %v941 = vpack.c.b16 %v584, %v563
  %v942 = vpack.c.b16 %v585, %v564
  %v943 = vpack.c.b16 %v586, %v565
  %v944 = vpack.c.b16 %v587, %v566
  %v945 = vpack.c.b16 %v588, %v567
  %v946 = vpack.c.b16 %v610, %v589
  %v947 = vpack.c.b16 %v611, %v590
  %v948 = vpack.c.b16 %v612, %v591
  %v949 = vpack.c.b16 %v613, %v592
  %v950 = vpack.c.b16 %v614, %v593
  %v951 = vpack.c.b16 %v615, %v594
  %v952 = vpack.c.b16 %v616, %v595
  %v953 = vpack.c.b16 %v617, %v596
  %v954 = vpack.c.b16 %v618, %v597
  %v955 = vpack.c.b16 %v619, %v598
  %v956 = vpack.c.b16 %v620, %v599
  %v957 = vpack.c.b16 %v621, %v600
  %v958 = vpack.c.b16 %v622, %v601
  %v959 = vpack.c.b16 %v623, %v602
  %v960 = vpack.c.b16 %v624, %v603
  %v961 = vpack.c.b16 %v625, %v604
  %v962 = vpack.c.b16 %v626, %v605
  %v963 = vpack.c.b16 %v627, %v606
  %v964 = vpack.c.b16 %v628, %v607
  %v965 = vpack.c.b16 %v629, %v608
  %v966 = vpack.c.b16 %v630, %v609
  %v967 = vpack.c.b16 %v652, %v631
  %v968 = vpack.c.b16 %v653, %v632
  %v969 = vpack.c.b16 %v654, %v633
  %v970 = vpack.c.b16 %v655, %v634
  %v971 = vpack.c.b16 %v656, %v635
  %v972 = vpack.c.b16 %v657, %v636
  %v973 = vpack.c.b16 %v658, %v637
  %v974 = vpack.c.b16 %v659, %v638
  %v975 = vpack.c.b16 %v660, %v639
  %v976 = vpack.c.b16 %v661, %v640
  %v977 = vpack.c.b16 %v662, %v641
  %v978 = vpack.c.b16 %v663, %v642
  %v979 = vpack.c.b16 %v664, %v643
  %v980 = vpack.c.b16 %v665, %v644
  %v981 = vpack.c.b16 %v666, %v645
  %v982 = vpack.c.b16 %v667, %v646
  %v983 = vpack.c.b16 %v668, %v647
  %v984 = vpack.c.b16 %v669, %v648
  %v985 = vpack.c.b16 %v670, %v649
  %v986 = vpack.c.b16 %v671, %v650
  %v987 = vpack.c.b16 %v672, %v651
  %v988 = vpack.c.b16 %v694, %v673
  %v989 = vpack.c.b16 %v695, %v674
  %v990 = vpack.c.b16 %v696, %v675
  %v991 = vpack.c.b16 %v697, %v676
  %v992 = vpack.c.b16 %v698, %v677
  %v993 = vpack.c.b16 %v699, %v678
  %v994 = vpack.c.b16 %v700, %v679
  %v995 = vpack.c.b16 %v701, %v680
  %v996 = vpack.c.b16 %v702, %v681
  %v997 = vpack.c.b16 %v703, %v682
  %v998 = vpack.c.b16 %v704, %v683
  %v999 = vpack.c.b16 %v705, %v684
  %v1000 = vpack.c.b16 %v706, %v685
  %v1001 = vpack.c.b16 %v707, %v686
  %v1002 = vpack.c.b16 %v708, %v687
  %v1003 = vpack.c.b16 %v709, %v688
  %v1004 = vpack.c.b16 %v710, %v689
  %v1005 = vpack.c.b16 %v711, %v690
  %v1006 = vpack.c.b16 %v712, %v691
  %v1007 = vpack.c.b16 %v713, %v692
  %v1008 = vpack.c.b16 %v714, %v693
  %v1009 = vpack.c.b16 %v736, %v715
  %v1010 = vpack.c.b16 %v737, %v716
  %v1011 = vpack.c.b16 %v738, %v717
  %v1012 = vpack.c.b16 %v739, %v718
  %v1013 = vpack.c.b16 %v740, %v719
  %v1014 = vpack.c.b16 %v741, %v720
  %v1015 = vpack.c.b16 %v742, %v721
  %v1016 = vpack.c.b16 %v743, %v722
  %v1017 = vpack.c.b16 %v744, %v723
  %v1018 = vpack.c.b16 %v745, %v724
  %v1019 = vpack.c.b16 %v746, %v725
  %v1020 = vpack.c.b16 %v747, %v726
  %v1021 = vpack.c.b16 %v748, %v727
  %v1022 = vpack.c.b16 %v749, %v728
  %v1023 = vpack.c.b16 %v750, %v729
  %v1024 = vpack.c.b16 %v751, %v730
  %v1025 = vpack.c.b16 %v752, %v731
  %v1026 = vpack.c.b16 %v753, %v732
  %v1027 = vpack.c.b16 %v754, %v733
  %v1028 = vpack.c.b16 %v755, %v734
  %v1029 = vpack.c.b16 %v756, %v735
  %v1030 = vpack.c.b16 %v778, %v757
  %v1031 = vpack.c.b16 %v779, %v758
  %v1032 = vpack.c.b16 %v780, %v759
  %v1033 = vpack.c.b16 %v781, %v760
  %v1034 = vpack.c.b16 %v782, %v761
  %v1035 = vpack.c.b16 %v783, %v762
  %v1036 = vpack.c.b16 %v784, %v763
  %v1037 = vpack.c.b16 %v785, %v764
  %v1038 = vpack.c.b16 %v786, %v765
  %v1039 = vpack.c.b16 %v787, %v766
  %v1040 = vpack.c.b16 %v788, %v767
  %v1041 = vpack.c.b16 %v789, %v768
  %v1042 = vpack.c.b16 %v790, %v769
  %v1043 = vpack.c.b16 %v791, %v770
  %v1044 = vpack.c.b16 %v792, %v771
  %v1045 = vpack.c.b16 %v793, %v772
  %v1046 = vpack.c.b16 %v794, %v773
  %v1047 = vpack.c.b16 %v795, %v774
  %v1048 = vpack.c.b16 %v796, %v775
  %v1049 = vpack.c.b16 %v797, %v776
  %v1050 = vpack.c.b16 %v798, %v777
  %v1051 = vpack.c.b16 %v820, %v799
  %v1052 = vpack.c.b16 %v821, %v800
  %v1053 = vpack.c.b16 %v822, %v801
  %v1054 = vpack.c.b16 %v823, %v802
  %v1055 = vpack.c.b16 %v824, %v803
  %v1056 = vpack.c.b16 %v825, %v804
  %v1057 = vpack.c.b16 %v826, %v805
  %v1058 = vpack.c.b16 %v827, %v806
  %v1059 = vpack.c.b16 %v828, %v807
  %v1060 = vpack.c.b16 %v829, %v808
  %v1061 = vpack.c.b16 %v830, %v809
  %v1062 = vpack.c.b16 %v831, %v810
  %v1063 = vpack.c.b16 %v832, %v811
  %v1064 = vpack.c.b16 %v833, %v812
  %v1065 = vpack.c.b16 %v834, %v813
  %v1066 = vpack.c.b16 %v835, %v814
  %v1067 = vpack.c.b16 %v836, %v815
  %v1068 = vpack.c.b16 %v837, %v816
  %v1069 = vpack.c.b16 %v838, %v817
  %v1070 = vpack.c.b16 %v839, %v818
  %v1071 = vpack.c.b16 %v840, %v819
  %v1072 = vpack.c.b16 %v862, %v841
  %v1073 = vpack.c.b16 %v863, %v842
  %v1074 = vpack.c.b16 %v864, %v843
  %v1075 = vpack.c.b16 %v865, %v844
  %v1076 = vpack.c.b16 %v866, %v845
  %v1077 = vpack.c.b16 %v867, %v846
  %v1078 = vpack.c.b16 %v868, %v847
  %v1079 = vpack.c.b16 %v869, %v848
  %v1080 = vpack.c.b16 %v870, %v849
  %v1081 = vpack.c.b16 %v871, %v850
  %v1082 = vpack.c.b16 %v872, %v851
  %v1083 = vpack.c.b16 %v873, %v852
  %v1084 = vpack.c.b16 %v874, %v853
  %v1085 = vpack.c.b16 %v875, %v854
  %v1086 = vpack.c.b16 %v876, %v855
  %v1087 = vpack.c.b16 %v877, %v856
  %v1088 = vpack.c.b16 %v878, %v857
  %v1089 = vpack.c.b16 %v879, %v858
  %v1090 = vpack.c.b16 %v880, %v859
  %v1091 = vpack.c.b16 %v881, %v860
  %v1092 = vpack.c.b16 %v882, %v861
  %vm1303 = vcmask 261120
  %v1305 = vsel %vm1303, %v241, 0
  %1307 = vmatprep.subr.bf16.mxu0 %v884
  %1308 = vmatpush1.bf16.msra.mxu0 %v883
  %1309 = vmatprep.subr.bf16.mxu0 %v905
  %1310 = vmatpush1.bf16.msra.mxu0 %v904
  %1311 = vmatprep.subr.bf16.mxu0 %v926
  %1312 = vmatpush1.bf16.msra.mxu0 %v925
  %1313 = vmatprep.subr.bf16.mxu0 %v947
  %1314 = vmatpush1.bf16.msra.mxu0 %v946
  %1315 = vmatprep.subr.bf16.mxu0 %v968
  %1316 = vmatpush1.bf16.msra.mxu0 %v967
  %1317 = vmatprep.subr.bf16.mxu0 %v989
  %1318 = vmatpush1.bf16.msra.mxu0 %v988
  %1319 = vmatprep.subr.bf16.mxu0 %v1010
  %1320 = vmatpush1.bf16.msra.mxu0 %v1009
  %1321 = vmatprep.subr.bf16.mxu0 %v1031
  %1322 = vmatpush1.bf16.msra.mxu0 %v1030
  %1323 = vmatprep.subr.bf16.mxu0 %v1052
  %1324 = vmatpush1.bf16.msra.mxu0 %v1051
  %1325 = vmatprep.subr.bf16.mxu0 %v1073
  %1326 = vmatpush1.bf16.msra.mxu0 %v1072
  %1327 = vmatprep.subr.bf16.mxu0 0
  %1328 = vmatpush1.bf16.msra.mxu0 0
  %1329 = vmatprep.subr.bf16.mxu0 0
  %1330 = vmatpush1.bf16.msra.mxu0 0
  %1331 = vmatprep.subr.bf16.mxu0 0
  %1332 = vmatpush1.bf16.msra.mxu0 0
  %1333 = vmatprep.subr.bf16.mxu0 0
  %1334 = vmatpush1.bf16.msra.mxu0 0
  %1335 = vmatprep.subr.bf16.mxu0 0
  %1336 = vmatpush1.bf16.msra.mxu0 0
  %1337 = vmatprep.subr.bf16.mxu0 0
  %1338 = vmatpush1.bf16.msra.mxu0 0
  %1339 = vmatprep.mubr.bf16.mxu0 %v1305
  %1340 = vmatmul.mubr.bf16.gmra.mrb[0].mxu0 %v240
  %v1341 = vpop.f32.mrb[0].mxu0
  %v1342 = vadd.f32 0.0, %v1341
  %v1343 = vpop.f32.mrb[0].mxu0
  %v1344 = vadd.f32 0.0, %v1343
  %v1345 = vpop.f32.mrb[0].mxu0
  %v1346 = vadd.f32 0.0, %v1345
  %v1347 = vpop.f32.mrb[0].mxu0
  %v1348 = vadd.f32 0.0, %v1347
  %1349 = vdwg.mxu0
  %1350 = vmatprep.subr.bf16.mxu0 %v886
  %1351 = vmatpush1.bf16.msra.mxu0 %v885
  %1352 = vmatprep.subr.bf16.mxu0 %v907
  %1353 = vmatpush1.bf16.msra.mxu0 %v906
  %1354 = vmatprep.subr.bf16.mxu0 %v928
  %1355 = vmatpush1.bf16.msra.mxu0 %v927
  %1356 = vmatprep.subr.bf16.mxu0 %v949
  %1357 = vmatpush1.bf16.msra.mxu0 %v948
  %1358 = vmatprep.subr.bf16.mxu0 %v970
  %1359 = vmatpush1.bf16.msra.mxu0 %v969
  %1360 = vmatprep.subr.bf16.mxu0 %v991
  %1361 = vmatpush1.bf16.msra.mxu0 %v990
  %1362 = vmatprep.subr.bf16.mxu0 %v1012
  %1363 = vmatpush1.bf16.msra.mxu0 %v1011
  %1364 = vmatprep.subr.bf16.mxu0 %v1033
  %1365 = vmatpush1.bf16.msra.mxu0 %v1032
  %1366 = vmatprep.subr.bf16.mxu0 %v1054
  %1367 = vmatpush1.bf16.msra.mxu0 %v1053
  %1368 = vmatprep.subr.bf16.mxu0 %v1075
  %1369 = vmatpush1.bf16.msra.mxu0 %v1074
  %1370 = vmatprep.subr.bf16.mxu0 0
  %1371 = vmatpush1.bf16.msra.mxu0 0
  %1372 = vmatprep.subr.bf16.mxu0 0
  %1373 = vmatpush1.bf16.msra.mxu0 0
  %1374 = vmatprep.subr.bf16.mxu0 0
  %1375 = vmatpush1.bf16.msra.mxu0 0
  %1376 = vmatprep.subr.bf16.mxu0 0
  %1377 = vmatpush1.bf16.msra.mxu0 0
  %1378 = vmatprep.subr.bf16.mxu0 0
  %1379 = vmatpush1.bf16.msra.mxu0 0
  %1380 = vmatprep.subr.bf16.mxu0 0
  %1381 = vmatpush1.bf16.msra.mxu0 0
  %1382 = vmatprep.mubr.bf16.mxu0 %v1305
  %1383 = vmatmul.mubr.bf16.gmra.mrb[0].mxu0 %v240
  %v1384 = vpop.f32.mrb[0].mxu0
  %v1385 = vadd.f32 0.0, %v1384
  %v1386 = vpop.f32.mrb[0].mxu0
  %v1387 = vadd.f32 0.0, %v1386
  %v1388 = vpop.f32.mrb[0].mxu0
  %v1389 = vadd.f32 0.0, %v1388
  %v1390 = vpop.f32.mrb[0].mxu0
  %v1391 = vadd.f32 0.0, %v1390
  %1392 = vdwg.mxu0
  %1393 = vmatprep.subr.bf16.mxu0 %v888
  %1394 = vmatpush1.bf16.msra.mxu0 %v887
  %1395 = vmatprep.subr.bf16.mxu0 %v909
  %1396 = vmatpush1.bf16.msra.mxu0 %v908
  %1397 = vmatprep.subr.bf16.mxu0 %v930
  %1398 = vmatpush1.bf16.msra.mxu0 %v929
  %1399 = vmatprep.subr.bf16.mxu0 %v951
  %1400 = vmatpush1.bf16.msra.mxu0 %v950
  %1401 = vmatprep.subr.bf16.mxu0 %v972
  %1402 = vmatpush1.bf16.msra.mxu0 %v971
  %1403 = vmatprep.subr.bf16.mxu0 %v993
  %1404 = vmatpush1.bf16.msra.mxu0 %v992
  %1405 = vmatprep.subr.bf16.mxu0 %v1014
  %1406 = vmatpush1.bf16.msra.mxu0 %v1013
  %1407 = vmatprep.subr.bf16.mxu0 %v1035
  %1408 = vmatpush1.bf16.msra.mxu0 %v1034
  %1409 = vmatprep.subr.bf16.mxu0 %v1056
  %1410 = vmatpush1.bf16.msra.mxu0 %v1055
  %1411 = vmatprep.subr.bf16.mxu0 %v1077
  %1412 = vmatpush1.bf16.msra.mxu0 %v1076
  %1413 = vmatprep.subr.bf16.mxu0 0
  %1414 = vmatpush1.bf16.msra.mxu0 0
  %1415 = vmatprep.subr.bf16.mxu0 0
  %1416 = vmatpush1.bf16.msra.mxu0 0
  %1417 = vmatprep.subr.bf16.mxu0 0
  %1418 = vmatpush1.bf16.msra.mxu0 0
  %1419 = vmatprep.subr.bf16.mxu0 0
  %1420 = vmatpush1.bf16.msra.mxu0 0
  %1421 = vmatprep.subr.bf16.mxu0 0
  %1422 = vmatpush1.bf16.msra.mxu0 0
  %1423 = vmatprep.subr.bf16.mxu0 0
  %1424 = vmatpush1.bf16.msra.mxu0 0
  %1425 = vmatprep.mubr.bf16.mxu0 %v1305
  %1426 = vmatmul.mubr.bf16.gmra.mrb[0].mxu0 %v240
  %v1427 = vpop.f32.mrb[0].mxu0
  %v1428 = vadd.f32 0.0, %v1427
  %v1429 = vpop.f32.mrb[0].mxu0
  %v1430 = vadd.f32 0.0, %v1429
  %v1431 = vpop.f32.mrb[0].mxu0
  %v1432 = vadd.f32 0.0, %v1431
  %v1433 = vpop.f32.mrb[0].mxu0
  %v1434 = vadd.f32 0.0, %v1433
  %1435 = vdwg.mxu0
  %1436 = vmatprep.subr.bf16.mxu0 %v890
  %1437 = vmatpush1.bf16.msra.mxu0 %v889
  %1438 = vmatprep.subr.bf16.mxu0 %v911
  %1439 = vmatpush1.bf16.msra.mxu0 %v910
  %1440 = vmatprep.subr.bf16.mxu0 %v932
  %1441 = vmatpush1.bf16.msra.mxu0 %v931
  %1442 = vmatprep.subr.bf16.mxu0 %v953
  %1443 = vmatpush1.bf16.msra.mxu0 %v952
  %1444 = vmatprep.subr.bf16.mxu0 %v974
  %1445 = vmatpush1.bf16.msra.mxu0 %v973
  %1446 = vmatprep.subr.bf16.mxu0 %v995
  %1447 = vmatpush1.bf16.msra.mxu0 %v994
  %1448 = vmatprep.subr.bf16.mxu0 %v1016
  %1449 = vmatpush1.bf16.msra.mxu0 %v1015
  %1450 = vmatprep.subr.bf16.mxu0 %v1037
  %1451 = vmatpush1.bf16.msra.mxu0 %v1036
  %1452 = vmatprep.subr.bf16.mxu0 %v1058
  %1453 = vmatpush1.bf16.msra.mxu0 %v1057
  %1454 = vmatprep.subr.bf16.mxu0 %v1079
  %1455 = vmatpush1.bf16.msra.mxu0 %v1078
  %1456 = vmatprep.subr.bf16.mxu0 0
  %1457 = vmatpush1.bf16.msra.mxu0 0
  %1458 = vmatprep.subr.bf16.mxu0 0
  %1459 = vmatpush1.bf16.msra.mxu0 0
  %1460 = vmatprep.subr.bf16.mxu0 0
  %1461 = vmatpush1.bf16.msra.mxu0 0
  %1462 = vmatprep.subr.bf16.mxu0 0
  %1463 = vmatpush1.bf16.msra.mxu0 0
  %1464 = vmatprep.subr.bf16.mxu0 0
  %1465 = vmatpush1.bf16.msra.mxu0 0
  %1466 = vmatprep.subr.bf16.mxu0 0
  %1467 = vmatpush1.bf16.msra.mxu0 0
  %1468 = vmatprep.mubr.bf16.mxu0 %v1305
  %1469 = vmatmul.mubr.bf16.gmra.mrb[0].mxu0 %v240
  %v1470 = vpop.f32.mrb[0].mxu0
  %v1471 = vadd.f32 0.0, %v1470
  %v1472 = vpop.f32.mrb[0].mxu0
  %v1473 = vadd.f32 0.0, %v1472
  %v1474 = vpop.f32.mrb[0].mxu0
  %v1475 = vadd.f32 0.0, %v1474
  %v1476 = vpop.f32.mrb[0].mxu0
  %v1477 = vadd.f32 0.0, %v1476
  %1478 = vdwg.mxu0
  %1479 = vmatprep.subr.bf16.mxu0 %v892
  %1480 = vmatpush1.bf16.msra.mxu0 %v891
  %1481 = vmatprep.subr.bf16.mxu0 %v913
  %1482 = vmatpush1.bf16.msra.mxu0 %v912
  %1483 = vmatprep.subr.bf16.mxu0 %v934
  %1484 = vmatpush1.bf16.msra.mxu0 %v933
  %1485 = vmatprep.subr.bf16.mxu0 %v955
  %1486 = vmatpush1.bf16.msra.mxu0 %v954
  %1487 = vmatprep.subr.bf16.mxu0 %v976
  %1488 = vmatpush1.bf16.msra.mxu0 %v975
  %1489 = vmatprep.subr.bf16.mxu0 %v997
  %1490 = vmatpush1.bf16.msra.mxu0 %v996
  %1491 = vmatprep.subr.bf16.mxu0 %v1018
  %1492 = vmatpush1.bf16.msra.mxu0 %v1017
  %1493 = vmatprep.subr.bf16.mxu0 %v1039
  %1494 = vmatpush1.bf16.msra.mxu0 %v1038
  %1495 = vmatprep.subr.bf16.mxu0 %v1060
  %1496 = vmatpush1.bf16.msra.mxu0 %v1059
  %1497 = vmatprep.subr.bf16.mxu0 %v1081
  %1498 = vmatpush1.bf16.msra.mxu0 %v1080
  %1499 = vmatprep.subr.bf16.mxu0 0
  %1500 = vmatpush1.bf16.msra.mxu0 0
  %1501 = vmatprep.subr.bf16.mxu0 0
  %1502 = vmatpush1.bf16.msra.mxu0 0
  %1503 = vmatprep.subr.bf16.mxu0 0
  %1504 = vmatpush1.bf16.msra.mxu0 0
  %1505 = vmatprep.subr.bf16.mxu0 0
  %1506 = vmatpush1.bf16.msra.mxu0 0
  %1507 = vmatprep.subr.bf16.mxu0 0
  %1508 = vmatpush1.bf16.msra.mxu0 0
  %1509 = vmatprep.subr.bf16.mxu0 0
  %1510 = vmatpush1.bf16.msra.mxu0 0
  %1511 = vmatprep.mubr.bf16.mxu0 %v1305
  %1512 = vmatmul.mubr.bf16.gmra.mrb[0].mxu0 %v240
  %v1513 = vpop.f32.mrb[0].mxu0
  %v1514 = vadd.f32 0.0, %v1513
  %v1515 = vpop.f32.mrb[0].mxu0
  %v1516 = vadd.f32 0.0, %v1515
  %v1517 = vpop.f32.mrb[0].mxu0
  %v1518 = vadd.f32 0.0, %v1517
  %v1519 = vpop.f32.mrb[0].mxu0
  %v1520 = vadd.f32 0.0, %v1519
  %1521 = vdwg.mxu0
  %1522 = vmatprep.subr.bf16.mxu0 %v894
  %1523 = vmatpush1.bf16.msra.mxu0 %v893
  %1524 = vmatprep.subr.bf16.mxu0 %v915
  %1525 = vmatpush1.bf16.msra.mxu0 %v914
  %1526 = vmatprep.subr.bf16.mxu0 %v936
  %1527 = vmatpush1.bf16.msra.mxu0 %v935
  %1528 = vmatprep.subr.bf16.mxu0 %v957
  %1529 = vmatpush1.bf16.msra.mxu0 %v956
  %1530 = vmatprep.subr.bf16.mxu0 %v978
  %1531 = vmatpush1.bf16.msra.mxu0 %v977
  %1532 = vmatprep.subr.bf16.mxu0 %v999
  %1533 = vmatpush1.bf16.msra.mxu0 %v998
  %1534 = vmatprep.subr.bf16.mxu0 %v1020
  %1535 = vmatpush1.bf16.msra.mxu0 %v1019
  %1536 = vmatprep.subr.bf16.mxu0 %v1041
  %1537 = vmatpush1.bf16.msra.mxu0 %v1040
  %1538 = vmatprep.subr.bf16.mxu0 %v1062
  %1539 = vmatpush1.bf16.msra.mxu0 %v1061
  %1540 = vmatprep.subr.bf16.mxu0 %v1083
  %1541 = vmatpush1.bf16.msra.mxu0 %v1082
  %1542 = vmatprep.subr.bf16.mxu0 0
  %1543 = vmatpush1.bf16.msra.mxu0 0
  %1544 = vmatprep.subr.bf16.mxu0 0
  %1545 = vmatpush1.bf16.msra.mxu0 0
  %1546 = vmatprep.subr.bf16.mxu0 0
  %1547 = vmatpush1.bf16.msra.mxu0 0
  %1548 = vmatprep.subr.bf16.mxu0 0
  %1549 = vmatpush1.bf16.msra.mxu0 0
  %1550 = vmatprep.subr.bf16.mxu0 0
  %1551 = vmatpush1.bf16.msra.mxu0 0
  %1552 = vmatprep.subr.bf16.mxu0 0
  %1553 = vmatpush1.bf16.msra.mxu0 0
  %1554 = vmatprep.mubr.bf16.mxu0 %v1305
  %1555 = vmatmul.mubr.bf16.gmra.mrb[0].mxu0 %v240
  %v1556 = vpop.f32.mrb[0].mxu0
  %v1557 = vadd.f32 0.0, %v1556
  %v1558 = vpop.f32.mrb[0].mxu0
  %v1559 = vadd.f32 0.0, %v1558
  %v1560 = vpop.f32.mrb[0].mxu0
  %v1561 = vadd.f32 0.0, %v1560
  %v1562 = vpop.f32.mrb[0].mxu0
  %v1563 = vadd.f32 0.0, %v1562
  %1564 = vdwg.mxu0
  %1565 = vmatprep.subr.bf16.mxu0 %v896
  %1566 = vmatpush1.bf16.msra.mxu0 %v895
  %1567 = vmatprep.subr.bf16.mxu0 %v917
  %1568 = vmatpush1.bf16.msra.mxu0 %v916
  %1569 = vmatprep.subr.bf16.mxu0 %v938
  %1570 = vmatpush1.bf16.msra.mxu0 %v937
  %1571 = vmatprep.subr.bf16.mxu0 %v959
  %1572 = vmatpush1.bf16.msra.mxu0 %v958
  %1573 = vmatprep.subr.bf16.mxu0 %v980
  %1574 = vmatpush1.bf16.msra.mxu0 %v979
  %1575 = vmatprep.subr.bf16.mxu0 %v1001
  %1576 = vmatpush1.bf16.msra.mxu0 %v1000
  %1577 = vmatprep.subr.bf16.mxu0 %v1022
  %1578 = vmatpush1.bf16.msra.mxu0 %v1021
  %1579 = vmatprep.subr.bf16.mxu0 %v1043
  %1580 = vmatpush1.bf16.msra.mxu0 %v1042
  %1581 = vmatprep.subr.bf16.mxu0 %v1064
  %1582 = vmatpush1.bf16.msra.mxu0 %v1063
  %1583 = vmatprep.subr.bf16.mxu0 %v1085
  %1584 = vmatpush1.bf16.msra.mxu0 %v1084
  %1585 = vmatprep.subr.bf16.mxu0 0
  %1586 = vmatpush1.bf16.msra.mxu0 0
  %1587 = vmatprep.subr.bf16.mxu0 0
  %1588 = vmatpush1.bf16.msra.mxu0 0
  %1589 = vmatprep.subr.bf16.mxu0 0
  %1590 = vmatpush1.bf16.msra.mxu0 0
  %1591 = vmatprep.subr.bf16.mxu0 0
  %1592 = vmatpush1.bf16.msra.mxu0 0
  %1593 = vmatprep.subr.bf16.mxu0 0
  %1594 = vmatpush1.bf16.msra.mxu0 0
  %1595 = vmatprep.subr.bf16.mxu0 0
  %1596 = vmatpush1.bf16.msra.mxu0 0
  %1597 = vmatprep.mubr.bf16.mxu0 %v1305
  %1598 = vmatmul.mubr.bf16.gmra.mrb[0].mxu0 %v240
  %v1599 = vpop.f32.mrb[0].mxu0
  %v1600 = vadd.f32 0.0, %v1599
  %v1601 = vpop.f32.mrb[0].mxu0
  %v1602 = vadd.f32 0.0, %v1601
  %v1603 = vpop.f32.mrb[0].mxu0
  %v1604 = vadd.f32 0.0, %v1603
  %v1605 = vpop.f32.mrb[0].mxu0
  %v1606 = vadd.f32 0.0, %v1605
  %1607 = vdwg.mxu0
  %1608 = vmatprep.subr.bf16.mxu0 %v898
  %1609 = vmatpush1.bf16.msra.mxu0 %v897
  %1610 = vmatprep.subr.bf16.mxu0 %v919
  %1611 = vmatpush1.bf16.msra.mxu0 %v918
  %1612 = vmatprep.subr.bf16.mxu0 %v940
  %1613 = vmatpush1.bf16.msra.mxu0 %v939
  %1614 = vmatprep.subr.bf16.mxu0 %v961
  %1615 = vmatpush1.bf16.msra.mxu0 %v960
  %1616 = vmatprep.subr.bf16.mxu0 %v982
  %1617 = vmatpush1.bf16.msra.mxu0 %v981
  %1618 = vmatprep.subr.bf16.mxu0 %v1003
  %1619 = vmatpush1.bf16.msra.mxu0 %v1002
  %1620 = vmatprep.subr.bf16.mxu0 %v1024
  %1621 = vmatpush1.bf16.msra.mxu0 %v1023
  %1622 = vmatprep.subr.bf16.mxu0 %v1045
  %1623 = vmatpush1.bf16.msra.mxu0 %v1044
  %1624 = vmatprep.subr.bf16.mxu0 %v1066
  %1625 = vmatpush1.bf16.msra.mxu0 %v1065
  %1626 = vmatprep.subr.bf16.mxu0 %v1087
  %1627 = vmatpush1.bf16.msra.mxu0 %v1086
  %1628 = vmatprep.subr.bf16.mxu0 0
  %1629 = vmatpush1.bf16.msra.mxu0 0
  %1630 = vmatprep.subr.bf16.mxu0 0
  %1631 = vmatpush1.bf16.msra.mxu0 0
  %1632 = vmatprep.subr.bf16.mxu0 0
  %1633 = vmatpush1.bf16.msra.mxu0 0
  %1634 = vmatprep.subr.bf16.mxu0 0
  %1635 = vmatpush1.bf16.msra.mxu0 0
  %1636 = vmatprep.subr.bf16.mxu0 0
  %1637 = vmatpush1.bf16.msra.mxu0 0
  %1638 = vmatprep.subr.bf16.mxu0 0
  %1639 = vmatpush1.bf16.msra.mxu0 0
  %1640 = vmatprep.mubr.bf16.mxu0 %v1305
  %1641 = vmatmul.mubr.bf16.gmra.mrb[0].mxu0 %v240
  %v1642 = vpop.f32.mrb[0].mxu0
  %v1643 = vadd.f32 0.0, %v1642
  %v1644 = vpop.f32.mrb[0].mxu0
  %v1645 = vadd.f32 0.0, %v1644
  %v1646 = vpop.f32.mrb[0].mxu0
  %v1647 = vadd.f32 0.0, %v1646
  %v1648 = vpop.f32.mrb[0].mxu0
  %v1649 = vadd.f32 0.0, %v1648
  %1650 = vdwg.mxu0
  %1651 = vmatprep.subr.bf16.mxu0 %v900
  %1652 = vmatpush1.bf16.msra.mxu0 %v899
  %1653 = vmatprep.subr.bf16.mxu0 %v921
  %1654 = vmatpush1.bf16.msra.mxu0 %v920
  %1655 = vmatprep.subr.bf16.mxu0 %v942
  %1656 = vmatpush1.bf16.msra.mxu0 %v941
  %1657 = vmatprep.subr.bf16.mxu0 %v963
  %1658 = vmatpush1.bf16.msra.mxu0 %v962
  %1659 = vmatprep.subr.bf16.mxu0 %v984
  %1660 = vmatpush1.bf16.msra.mxu0 %v983
  %1661 = vmatprep.subr.bf16.mxu0 %v1005
  %1662 = vmatpush1.bf16.msra.mxu0 %v1004
  %1663 = vmatprep.subr.bf16.mxu0 %v1026
  %1664 = vmatpush1.bf16.msra.mxu0 %v1025
  %1665 = vmatprep.subr.bf16.mxu0 %v1047
  %1666 = vmatpush1.bf16.msra.mxu0 %v1046
  %1667 = vmatprep.subr.bf16.mxu0 %v1068
  %1668 = vmatpush1.bf16.msra.mxu0 %v1067
  %1669 = vmatprep.subr.bf16.mxu0 %v1089
  %1670 = vmatpush1.bf16.msra.mxu0 %v1088
  %1671 = vmatprep.subr.bf16.mxu0 0
  %1672 = vmatpush1.bf16.msra.mxu0 0
  %1673 = vmatprep.subr.bf16.mxu0 0
  %1674 = vmatpush1.bf16.msra.mxu0 0
  %1675 = vmatprep.subr.bf16.mxu0 0
  %1676 = vmatpush1.bf16.msra.mxu0 0
  %1677 = vmatprep.subr.bf16.mxu0 0
  %1678 = vmatpush1.bf16.msra.mxu0 0
  %1679 = vmatprep.subr.bf16.mxu0 0
  %1680 = vmatpush1.bf16.msra.mxu0 0
  %1681 = vmatprep.subr.bf16.mxu0 0
  %1682 = vmatpush1.bf16.msra.mxu0 0
  %1683 = vmatprep.mubr.bf16.mxu0 %v1305
  %1684 = vmatmul.mubr.bf16.gmra.mrb[0].mxu0 %v240
  %v1685 = vpop.f32.mrb[0].mxu0
  %v1686 = vadd.f32 0.0, %v1685
  %v1687 = vpop.f32.mrb[0].mxu0
  %v1688 = vadd.f32 0.0, %v1687
  %v1689 = vpop.f32.mrb[0].mxu0
  %v1690 = vadd.f32 0.0, %v1689
  %v1691 = vpop.f32.mrb[0].mxu0
  %v1692 = vadd.f32 0.0, %v1691
  %1693 = vdwg.mxu0
  %1694 = vmatprep.subr.bf16.mxu0 %v902
  %1695 = vmatpush1.bf16.msra.mxu0 %v901
  %1696 = vmatprep.subr.bf16.mxu0 %v923
  %1697 = vmatpush1.bf16.msra.mxu0 %v922
  %1698 = vmatprep.subr.bf16.mxu0 %v944
  %1699 = vmatpush1.bf16.msra.mxu0 %v943
  %1700 = vmatprep.subr.bf16.mxu0 %v965
  %1701 = vmatpush1.bf16.msra.mxu0 %v964
  %1702 = vmatprep.subr.bf16.mxu0 %v986
  %1703 = vmatpush1.bf16.msra.mxu0 %v985
  %1704 = vmatprep.subr.bf16.mxu0 %v1007
  %1705 = vmatpush1.bf16.msra.mxu0 %v1006
  %1706 = vmatprep.subr.bf16.mxu0 %v1028
  %1707 = vmatpush1.bf16.msra.mxu0 %v1027
  %1708 = vmatprep.subr.bf16.mxu0 %v1049
  %1709 = vmatpush1.bf16.msra.mxu0 %v1048
  %1710 = vmatprep.subr.bf16.mxu0 %v1070
  %1711 = vmatpush1.bf16.msra.mxu0 %v1069
  %1712 = vmatprep.subr.bf16.mxu0 %v1091
  %1713 = vmatpush1.bf16.msra.mxu0 %v1090
  %1714 = vmatprep.subr.bf16.mxu0 0
  %1715 = vmatpush1.bf16.msra.mxu0 0
  %1716 = vmatprep.subr.bf16.mxu0 0
  %1717 = vmatpush1.bf16.msra.mxu0 0
  %1718 = vmatprep.subr.bf16.mxu0 0
  %1719 = vmatpush1.bf16.msra.mxu0 0
  %1720 = vmatprep.subr.bf16.mxu0 0
  %1721 = vmatpush1.bf16.msra.mxu0 0
  %1722 = vmatprep.subr.bf16.mxu0 0
  %1723 = vmatpush1.bf16.msra.mxu0 0
  %1724 = vmatprep.subr.bf16.mxu0 0
  %1725 = vmatpush1.bf16.msra.mxu0 0
  %1726 = vmatprep.mubr.bf16.mxu0 %v1305
  %1727 = vmatmul.mubr.bf16.gmra.mrb[0].mxu0 %v240
  %v1728 = vpop.f32.mrb[0].mxu0
  %v1729 = vadd.f32 0.0, %v1728
  %v1730 = vpop.f32.mrb[0].mxu0
  %v1731 = vadd.f32 0.0, %v1730
  %v1732 = vpop.f32.mrb[0].mxu0
  %v1733 = vadd.f32 0.0, %v1732
  %v1734 = vpop.f32.mrb[0].mxu0
  %v1735 = vadd.f32 0.0, %v1734
  %1736 = vdwg.mxu0
  %1737 = vmatprep.subr.bf16.mxu0 0
  %1738 = vmatpush1.bf16.msra.mxu0 %v903
  %1739 = vmatprep.subr.bf16.mxu0 0
  %1740 = vmatpush1.bf16.msra.mxu0 %v924
  %1741 = vmatprep.subr.bf16.mxu0 0
  %1742 = vmatpush1.bf16.msra.mxu0 %v945
  %1743 = vmatprep.subr.bf16.mxu0 0
  %1744 = vmatpush1.bf16.msra.mxu0 %v966
  %1745 = vmatprep.subr.bf16.mxu0 0
  %1746 = vmatpush1.bf16.msra.mxu0 %v987
  %1747 = vmatprep.subr.bf16.mxu0 0
  %1748 = vmatpush1.bf16.msra.mxu0 %v1008
  %1749 = vmatprep.subr.bf16.mxu0 0
  %1750 = vmatpush1.bf16.msra.mxu0 %v1029
  %1751 = vmatprep.subr.bf16.mxu0 0
  %1752 = vmatpush1.bf16.msra.mxu0 %v1050
  %1753 = vmatprep.subr.bf16.mxu0 0
  %1754 = vmatpush1.bf16.msra.mxu0 %v1071
  %1755 = vmatprep.subr.bf16.mxu0 0
  %1756 = vmatpush1.bf16.msra.mxu0 %v1092
  %1757 = vmatprep.subr.bf16.mxu0 0
  %1758 = vmatpush1.bf16.msra.mxu0 0
  %1759 = vmatprep.subr.bf16.mxu0 0
  %1760 = vmatpush1.bf16.msra.mxu0 0
  %1761 = vmatprep.subr.bf16.mxu0 0
  %1762 = vmatpush1.bf16.msra.mxu0 0
  %1763 = vmatprep.subr.bf16.mxu0 0
  %1764 = vmatpush1.bf16.msra.mxu0 0
  %1765 = vmatprep.subr.bf16.mxu0 0
  %1766 = vmatpush1.bf16.msra.mxu0 0
  %1767 = vmatprep.subr.bf16.mxu0 0
  %1768 = vmatpush1.bf16.msra.mxu0 0
  %1769 = vmatprep.mubr.bf16.mxu0 %v1305
  %1770 = vmatmul.mubr.bf16.gmra.mrb[0].mxu0 %v240
  %v1771 = vpop.f32.mrb[0].mxu0
  %v1772 = vadd.f32 0.0, %v1771
  %v1773 = vpop.f32.mrb[0].mxu0
  %v1774 = vpop.f32.mrb[0].mxu0
  %v1775 = vadd.f32 0.0, %v1774
  %v1776 = vpop.f32.mrb[0].mxu0
  %1777 = vdwg.mxu0
  %v1778 = vpack.c.bf16 %v1346, %v1342
  %v1779 = vpack.c.bf16 %v1348, %v1344
  %v1780 = vpack.c.bf16 %v1389, %v1385
  %v1781 = vpack.c.bf16 %v1391, %v1387
  %v1782 = vpack.c.bf16 %v1432, %v1428
  %v1783 = vpack.c.bf16 %v1434, %v1430
  %v1784 = vpack.c.bf16 %v1475, %v1471
  %v1785 = vpack.c.bf16 %v1477, %v1473
  %v1786 = vpack.c.bf16 %v1518, %v1514
  %v1787 = vpack.c.bf16 %v1520, %v1516
  %v1788 = vpack.c.bf16 %v1561, %v1557
  %v1789 = vpack.c.bf16 %v1563, %v1559
  %v1790 = vpack.c.bf16 %v1604, %v1600
  %v1791 = vpack.c.bf16 %v1606, %v1602
  %v1792 = vpack.c.bf16 %v1647, %v1643
  %v1793 = vpack.c.bf16 %v1649, %v1645
  %v1794 = vpack.c.bf16 %v1690, %v1686
  %v1795 = vpack.c.bf16 %v1692, %v1688
  %v1796 = vpack.c.bf16 %v1733, %v1729
  %v1797 = vpack.c.bf16 %v1735, %v1731
  %v1798 = vpack.c.bf16 %v1775, %v1772
  %v1820 = vunpack.c.l.b16 %v1778
  %v1821 = vunpack.c.l.b16 %v1779
  %v1822 = vunpack.c.l.b16 %v1780
  %v1823 = vunpack.c.l.b16 %v1781
  %v1824 = vunpack.c.l.b16 %v1782
  %v1825 = vunpack.c.l.b16 %v1783
  %v1826 = vunpack.c.l.b16 %v1784
  %v1827 = vunpack.c.l.b16 %v1785
  %v1828 = vunpack.c.l.b16 %v1786
  %v1829 = vunpack.c.l.b16 %v1787
  %v1830 = vunpack.c.l.b16 %v1788
  %v1831 = vunpack.c.l.b16 %v1789
  %v1832 = vunpack.c.l.b16 %v1790
  %v1833 = vunpack.c.l.b16 %v1791
  %v1834 = vunpack.c.l.b16 %v1792
  %v1835 = vunpack.c.l.b16 %v1793
  %v1836 = vunpack.c.l.b16 %v1794
  %v1837 = vunpack.c.l.b16 %v1795
  %v1838 = vunpack.c.l.b16 %v1796
  %v1839 = vunpack.c.l.b16 %v1797
  %v1840 = vunpack.c.l.b16 %v1798
  %v1841 = vunpack.c.h.b16 %v1778
  %v1842 = vunpack.c.h.b16 %v1779
  %v1843 = vunpack.c.h.b16 %v1780
  %v1844 = vunpack.c.h.b16 %v1781
  %v1845 = vunpack.c.h.b16 %v1782
  %v1846 = vunpack.c.h.b16 %v1783
  %v1847 = vunpack.c.h.b16 %v1784
  %v1848 = vunpack.c.h.b16 %v1785
  %v1849 = vunpack.c.h.b16 %v1786
  %v1850 = vunpack.c.h.b16 %v1787
  %v1851 = vunpack.c.h.b16 %v1788
  %v1852 = vunpack.c.h.b16 %v1789
  %v1853 = vunpack.c.h.b16 %v1790
  %v1854 = vunpack.c.h.b16 %v1791
  %v1855 = vunpack.c.h.b16 %v1792
  %v1856 = vunpack.c.h.b16 %v1793
  %v1857 = vunpack.c.h.b16 %v1794
  %v1858 = vunpack.c.h.b16 %v1795
  %v1859 = vunpack.c.h.b16 %v1796
  %v1860 = vunpack.c.h.b16 %v1797
  %v1861 = vunpack.c.h.b16 %v1798
  %v1862 = vpack.c.b16 %v1821, %v1820
  %v1863 = vpack.c.b16 %v1823, %v1822
  %v1864 = vpack.c.b16 %v1825, %v1824
  %v1865 = vpack.c.b16 %v1827, %v1826
  %v1866 = vpack.c.b16 %v1829, %v1828
  %v1867 = vpack.c.b16 %v1831, %v1830
  %v1868 = vpack.c.b16 %v1833, %v1832
  %v1869 = vpack.c.b16 %v1835, %v1834
  %v1870 = vpack.c.b16 %v1837, %v1836
  %v1871 = vpack.c.b16 %v1839, %v1838
  %v1872 = vpack.c.b16 %v1840, %v1840
  %v1873 = vpack.c.b16 %v1842, %v1841
  %v1874 = vpack.c.b16 %v1844, %v1843
  %v1875 = vpack.c.b16 %v1846, %v1845
  %v1876 = vpack.c.b16 %v1848, %v1847
  %v1877 = vpack.c.b16 %v1850, %v1849
  %v1878 = vpack.c.b16 %v1852, %v1851
  %v1879 = vpack.c.b16 %v1854, %v1853
  %v1880 = vpack.c.b16 %v1856, %v1855
  %v1881 = vpack.c.b16 %v1858, %v1857
  %v1882 = vpack.c.b16 %v1860, %v1859
  %v1883 = vpack.c.b16 %v1861, %v1861
  %1906 = vst [vmem:[%s2] sm:$0xff] %v1862
  %1907 = vst [vmem:[%s2 + $0x8] sm:$0xff] %v1863
  %1908 = vst [vmem:[%s2 + $0x10] sm:$0xff] %v1864
  %1909 = vst [vmem:[%s2 + $0x18] sm:$0xff] %v1865
  %1910 = vst [vmem:[%s2 + $0x20] sm:$0xff] %v1866
  %1911 = vst [vmem:[%s2 + $0x28] sm:$0xff] %v1867
  %1912 = vst [vmem:[%s2 + $0x30] sm:$0xff] %v1868
  %1913 = vst [vmem:[%s2 + $0x38] sm:$0xff] %v1869
  %1914 = vst [vmem:[%s2 + $0x40] sm:$0xff] %v1870
  %1915 = vst [vmem:[%s2 + $0x48] sm:$0xff] %v1871
  %1916 = vst [vmem:[%s2 + $0x50] sm:$0xf] %v1872
  %1917 = vst [vmem:[%s2 + $0x54] sm:$0xff] %v1873
  %1918 = vst [vmem:[%s2 + $0x5c] sm:$0xff] %v1874
  %1919 = vst [vmem:[%s2 + $0x64] sm:$0xff] %v1875
  %1920 = vst [vmem:[%s2 + $0x6c] sm:$0xff] %v1876
  %1921 = vst [vmem:[%s2 + $0x74] sm:$0xff] %v1877
  %1922 = vst [vmem:[%s2 + $0x7c] sm:$0xff] %v1878
  %1923 = vst [vmem:[%s2 + $0x84] sm:$0xff] %v1879
  %1924 = vst [vmem:[%s2 + $0x8c] sm:$0xff] %v1880
  %1925 = vst [vmem:[%s2 + $0x94] sm:$0xff] %v1881
  %1926 = vst [vmem:[%s2 + $0x9c] sm:$0xff] %v1882
  %1927 = vst [vmem:[%s2 + $0xa4] sm:$0xf] %v1883
  // Predicated region
  $region10: #{_lambda_.2} parent=0 // pred_check
    _
  $region11: #{_lambda_.2} parent=0 // pred_check_branch
    %1929 = sbr.rel (0) target = $region13
  $region12: #{_lambda_.2} parent=0 // pred_region
    _
  $region13: #{_lambda_.2} parent=0 // pred_fallthru
    _
  // Predicated region
  $region14: #{_lambda_.2} parent=0 // pred_check
    _
  $region15: #{_lambda_.2} parent=0 // pred_check_branch
    %1931 = sbr.rel (0) target = $region17
  $region16: #{_lambda_.2} parent=0 // pred_region
    _
  $region17: #{_lambda_.2} parent=0 // pred_fallthru
    _

// kernel: _lambda_.3
$region0: #{_lambda_.3}
  #allocation0 [shape = 'u32[]', space=smem, size = 0x4, offset = 0x4, fixed_abs, tag = 'smem constant byte address 0x4 - core index']
  #allocation1 [shape = 'u32[144,128]{1,0:T(1,128)}', space=vmem, size = 0x12000, scoped, tag = 'internal scratch']
  %s0 = inlined_call_operand.vmem [shape: bf16[192,16], index: 0, kind: input, shape index: {}]
  %s1 = inlined_call_operand.vmem [shape: bf16[16,2688], index: 1, kind: input, shape index: {}]
  %s2 = inlined_call_operand.vmem [shape: bf16[16,896], index: 2, kind: input, shape index: {}]
  %s3 = inlined_call_operand.vmem [shape: f32[16,2688], index: 3, kind: output, shape index: {}]
  %s4 = sld [smem:[#allocation0]]
  $region22: #{_lambda_.3} parent=0
    _
  %s6 = ssub.s32 1, %s4
  %s7 = scalar_select 0, %s6, %s4
  // Predicated region
  $region2: #{_lambda_.3} parent=0 // pred_check
    _
  $region3: #{_lambda_.3} parent=0 // pred_check_branch
    %9 = sbr.rel (0) target = $region5
  $region4: #{_lambda_.3} parent=0 // pred_region
    _
  $region5: #{_lambda_.3} parent=0 // pred_fallthru
    _
  // Predicated region
  $region6: #{_lambda_.3} parent=0 // pred_check
    _
  $region7: #{_lambda_.3} parent=0 // pred_check_branch
    %11 = sbr.rel (0) target = $region9
  $region8: #{_lambda_.3} parent=0 // pred_region
    _
  $region9: #{_lambda_.3} parent=0 // pred_fallthru
    _
  // Predicated region
  $region10: #{_lambda_.3} parent=0 // pred_check
    _
  $region11: #{_lambda_.3} parent=0 // pred_check_branch
    %13 = sbr.rel (0) target = $region13
  $region12: #{_lambda_.3} parent=0 // pred_region
    _
  $region13: #{_lambda_.3} parent=0 // pred_fallthru
    _
  %v15 = vld [vmem:[%s0] sm:$0xf]
  %v16 = vld [vmem:[%s0 + $0x4] sm:$0xf]
  %v17 = vld [vmem:[%s0 + $0x8] sm:$0xf]
  %v18 = vld [vmem:[%s0 + $0xc] sm:$0xf]
  %v19 = vld [vmem:[%s0 + $0x10] sm:$0xf]
  %v20 = vld [vmem:[%s0 + $0x14] sm:$0xf]
  %v21 = vld [vmem:[%s0 + $0x18] sm:$0xf]
  %v22 = vld [vmem:[%s0 + $0x1c] sm:$0xf]
  %v23 = vld [vmem:[%s0 + $0x20] sm:$0xf]
  %v24 = vld [vmem:[%s0 + $0x24] sm:$0xf]
  %v25 = vld [vmem:[%s0 + $0x28] sm:$0xf]
  %v26 = vld [vmem:[%s0 + $0x2c] sm:$0xf]
  %v27 = vld [vmem:[%s0 + $0x30] sm:$0xf]
  %v28 = vld [vmem:[%s0 + $0x34] sm:$0xf]
  %v29 = vld [vmem:[%s0 + $0x38] sm:$0xf]
  %v30 = vld [vmem:[%s0 + $0x3c] sm:$0xf]
  %v31 = vld [vmem:[%s0 + $0x40] sm:$0xf]
  %v32 = vld [vmem:[%s0 + $0x44] sm:$0xf]
  %v33 = vld [vmem:[%s0 + $0x48] sm:$0xf]
  %v34 = vld [vmem:[%s0 + $0x4c] sm:$0xf]
  %v35 = vld [vmem:[%s0 + $0x50] sm:$0xf]
  %v36 = vld [vmem:[%s0 + $0x54] sm:$0xf]
  %v37 = vld [vmem:[%s0 + $0x58] sm:$0xf]
  %v38 = vld [vmem:[%s0 + $0x5c] sm:$0xf]
  %v39 = vld [vmem:[%s2] sm:$0xff]
  %v40 = vld [vmem:[%s2 + $0x8] sm:$0xff]
  %v41 = vld [vmem:[%s2 + $0x10] sm:$0xff]
  %v42 = vld [vmem:[%s2 + $0x18] sm:$0xf]
  %v43 = vld [vmem:[%s2 + $0x1c] sm:$0xff]
  %v44 = vld [vmem:[%s2 + $0x24] sm:$0xff]
  %v45 = vld [vmem:[%s2 + $0x2c] sm:$0xff]
  %v46 = vld [vmem:[%s2 + $0x34] sm:$0xf]
  %v71 = vunpack.c.l.b16 %v15
  %v72 = vunpack.c.l.b16 %v16
  %v73 = vunpack.c.l.b16 %v17
  %v74 = vunpack.c.l.b16 %v18
  %v75 = vunpack.c.l.b16 %v19
  %v76 = vunpack.c.l.b16 %v20
  %v77 = vunpack.c.l.b16 %v21
  %v78 = vunpack.c.l.b16 %v22
  %v79 = vunpack.c.l.b16 %v23
  %v80 = vunpack.c.l.b16 %v24
  %v81 = vunpack.c.l.b16 %v25
  %v82 = vunpack.c.l.b16 %v26
  %v83 = vunpack.c.l.b16 %v27
  %v84 = vunpack.c.l.b16 %v28
  %v85 = vunpack.c.l.b16 %v29
  %v86 = vunpack.c.l.b16 %v30
  %v87 = vunpack.c.l.b16 %v31
  %v88 = vunpack.c.l.b16 %v32
  %v89 = vunpack.c.l.b16 %v33
  %v90 = vunpack.c.l.b16 %v34
  %v91 = vunpack.c.l.b16 %v35
  %v92 = vunpack.c.l.b16 %v36
  %v93 = vunpack.c.l.b16 %v37
  %v94 = vunpack.c.l.b16 %v38
  %v95 = vpack.c.b16 %v72, %v71
  %v96 = vpack.c.b16 %v74, %v73
  %v97 = vpack.c.b16 %v76, %v75
  %v98 = vpack.c.b16 %v78, %v77
  %v99 = vpack.c.b16 %v80, %v79
  %v100 = vpack.c.b16 %v82, %v81
  %v101 = vpack.c.b16 %v84, %v83
  %v102 = vpack.c.b16 %v86, %v85
  %v103 = vpack.c.b16 %v88, %v87
  %v104 = vpack.c.b16 %v90, %v89
  %v105 = vpack.c.b16 %v92, %v91
  %v106 = vpack.c.b16 %v94, %v93
  %v115 = vunpack.c.l.b16 %v39
  %v116 = vunpack.c.h.b16 %v39
  %v117 = vunpack.c.l.b16 %v40
  %v118 = vunpack.c.h.b16 %v40
  %v119 = vunpack.c.l.b16 %v41
  %v120 = vunpack.c.h.b16 %v41
  %v121 = vunpack.c.l.b16 %v42
  %v122 = vunpack.c.l.b16 %v43
  %v123 = vunpack.c.h.b16 %v43
  %v124 = vunpack.c.l.b16 %v44
  %v125 = vunpack.c.h.b16 %v44
  %v126 = vunpack.c.l.b16 %v45
  %v127 = vunpack.c.h.b16 %v45
  %v128 = vunpack.c.l.b16 %v46
  %v129 = vpack.c.b16 %v122, %v115
  %v130 = vpack.c.b16 %v123, %v116
  %v131 = vpack.c.b16 %v124, %v117
  %v132 = vpack.c.b16 %v125, %v118
  %v133 = vpack.c.b16 %v126, %v119
  %v134 = vpack.c.b16 %v127, %v120
  %v135 = vpack.c.b16 %v128, %v121
  %vm143 = vcmask 130048
  %v145 = vsel %vm143, %v95, 0
  %v148 = vsel %vm143, %v96, 0
  %v151 = vsel %vm143, %v97, 0
  %v154 = vsel %vm143, %v98, 0
  %v157 = vsel %vm143, %v99, 0
  %v160 = vsel %vm143, %v100, 0
  %v163 = vsel %vm143, %v101, 0
  %v166 = vsel %vm143, %v102, 0
  %v169 = vsel %vm143, %v103, 0
  %v172 = vsel %vm143, %v104, 0
  %v175 = vsel %vm143, %v105, 0
  %v178 = vsel %vm143, %v106, 0
  %180 = vmatprep.subr.bf16.mxu0 %v130
  %181 = vmatpush1.bf16.msra.mxu0 %v129
  %182 = vmatprep.subr.bf16.mxu0 0
  %183 = vmatpush1.bf16.msra.mxu0 0
  %184 = vmatprep.subr.bf16.mxu0 0
  %185 = vmatpush1.bf16.msra.mxu0 0
  %186 = vmatprep.subr.bf16.mxu0 0
  %187 = vmatpush1.bf16.msra.mxu0 0
  %188 = vmatprep.subr.bf16.mxu0 0
  %189 = vmatpush1.bf16.msra.mxu0 0
  %190 = vmatprep.subr.bf16.mxu0 0
  %191 = vmatpush1.bf16.msra.mxu0 0
  %192 = vmatprep.subr.bf16.mxu0 0
  %193 = vmatpush1.bf16.msra.mxu0 0
  %194 = vmatprep.subr.bf16.mxu0 0
  %195 = vmatpush1.bf16.msra.mxu0 0
  %196 = vmatprep.subr.bf16.mxu0 0
  %197 = vmatpush1.bf16.msra.mxu0 0
  %198 = vmatprep.subr.bf16.mxu0 0
  %199 = vmatpush1.bf16.msra.mxu0 0
  %200 = vmatprep.subr.bf16.mxu0 0
  %201 = vmatpush1.bf16.msra.mxu0 0
  %202 = vmatprep.subr.bf16.mxu0 0
  %203 = vmatpush1.bf16.msra.mxu0 0
  %204 = vmatprep.subr.bf16.mxu0 0
  %205 = vmatpush1.bf16.msra.mxu0 0
  %206 = vmatprep.subr.bf16.mxu0 0
  %207 = vmatpush1.bf16.msra.mxu0 0
  %208 = vmatprep.subr.bf16.mxu0 0
  %209 = vmatpush1.bf16.msra.mxu0 0
  %210 = vmatprep.subr.bf16.mxu0 0
  %211 = vmatpush1.bf16.msra.mxu0 0
  %212 = vmatprep.mubr.bf16.mxu0 0
  %213 = vmatmul.mubr.bf16.gmra.mrb[0].mxu0 %v145
  %v214 = vpop.f32.mrb[0].mxu0
  %v215 = vadd.f32 0.0, %v214
  %v216 = vpop.f32.mrb[0].mxu0
  %v217 = vadd.f32 0.0, %v216
  %v218 = vpop.f32.mrb[0].mxu0
  %v219 = vadd.f32 0.0, %v218
  %v220 = vpop.f32.mrb[0].mxu0
  %v221 = vadd.f32 0.0, %v220
  %222 = vmatprep.mubr.bf16.mxu0 0
  %223 = vmatmul.mubr.bf16.gmra.mrb[0].mxu0 %v148
  %v224 = vpop.f32.mrb[0].mxu0
  %v225 = vadd.f32 0.0, %v224
  %v226 = vpop.f32.mrb[0].mxu0
  %v227 = vadd.f32 0.0, %v226
  %v228 = vpop.f32.mrb[0].mxu0
  %v229 = vadd.f32 0.0, %v228
  %v230 = vpop.f32.mrb[0].mxu0
  %v231 = vadd.f32 0.0, %v230
  %232 = vmatprep.mubr.bf16.mxu0 0
  %233 = vmatmul.mubr.bf16.gmra.mrb[0].mxu0 %v151
  %v234 = vpop.f32.mrb[0].mxu0
  %v235 = vadd.f32 0.0, %v234
  %v236 = vpop.f32.mrb[0].mxu0
  %v237 = vadd.f32 0.0, %v236
  %v238 = vpop.f32.mrb[0].mxu0
  %v239 = vadd.f32 0.0, %v238
  %v240 = vpop.f32.mrb[0].mxu0
  %v241 = vadd.f32 0.0, %v240
  %242 = vmatprep.mubr.bf16.mxu0 0
  %243 = vmatmul.mubr.bf16.gmra.mrb[0].mxu0 %v154
  %v244 = vpop.f32.mrb[0].mxu0
  %v245 = vadd.f32 0.0, %v244
  %v246 = vpop.f32.mrb[0].mxu0
  %v247 = vadd.f32 0.0, %v246
  %v248 = vpop.f32.mrb[0].mxu0
  %v249 = vadd.f32 0.0, %v248
  %v250 = vpop.f32.mrb[0].mxu0
  %v251 = vadd.f32 0.0, %v250
  %252 = vmatprep.mubr.bf16.mxu0 0
  %253 = vmatmul.mubr.bf16.gmra.mrb[0].mxu0 %v157
  %v254 = vpop.f32.mrb[0].mxu0
  %v255 = vadd.f32 0.0, %v254
  %v256 = vpop.f32.mrb[0].mxu0
  %v257 = vadd.f32 0.0, %v256
  %v258 = vpop.f32.mrb[0].mxu0
  %v259 = vadd.f32 0.0, %v258
  %v260 = vpop.f32.mrb[0].mxu0
  %v261 = vadd.f32 0.0, %v260
  %262 = vmatprep.mubr.bf16.mxu0 0
  %263 = vmatmul.mubr.bf16.gmra.mrb[0].mxu0 %v160
  %v264 = vpop.f32.mrb[0].mxu0
  %v265 = vadd.f32 0.0, %v264
  %v266 = vpop.f32.mrb[0].mxu0
  %v267 = vadd.f32 0.0, %v266
  %v268 = vpop.f32.mrb[0].mxu0
  %v269 = vadd.f32 0.0, %v268
  %v270 = vpop.f32.mrb[0].mxu0
  %v271 = vadd.f32 0.0, %v270
  %272 = vmatprep.mubr.bf16.mxu0 0
  %273 = vmatmul.mubr.bf16.gmra.mrb[0].mxu0 %v163
  %v274 = vpop.f32.mrb[0].mxu0
  %v275 = vadd.f32 0.0, %v274
  %v276 = vpop.f32.mrb[0].mxu0
  %v277 = vadd.f32 0.0, %v276
  %v278 = vpop.f32.mrb[0].mxu0
  %v279 = vadd.f32 0.0, %v278
  %v280 = vpop.f32.mrb[0].mxu0
  %v281 = vadd.f32 0.0, %v280
  %282 = vmatprep.mubr.bf16.mxu0 0
  %283 = vmatmul.mubr.bf16.gmra.mrb[0].mxu0 %v166
  %v284 = vpop.f32.mrb[0].mxu0
  %v285 = vadd.f32 0.0, %v284
  %v286 = vpop.f32.mrb[0].mxu0
  %v287 = vadd.f32 0.0, %v286
  %v288 = vpop.f32.mrb[0].mxu0
  %v289 = vadd.f32 0.0, %v288
  %v290 = vpop.f32.mrb[0].mxu0
  %v291 = vadd.f32 0.0, %v290
  %292 = vmatprep.mubr.bf16.mxu0 0
  %293 = vmatmul.mubr.bf16.gmra.mrb[0].mxu0 %v169
  %v294 = vpop.f32.mrb[0].mxu0
  %v295 = vadd.f32 0.0, %v294
  %v296 = vpop.f32.mrb[0].mxu0
  %v297 = vadd.f32 0.0, %v296
  %v298 = vpop.f32.mrb[0].mxu0
  %v299 = vadd.f32 0.0, %v298
  %v300 = vpop.f32.mrb[0].mxu0
  %v301 = vadd.f32 0.0, %v300
  %302 = vmatprep.mubr.bf16.mxu0 0
  %303 = vmatmul.mubr.bf16.gmra.mrb[0].mxu0 %v172
  %v304 = vpop.f32.mrb[0].mxu0
  %v305 = vadd.f32 0.0, %v304
  %v306 = vpop.f32.mrb[0].mxu0
  %v307 = vadd.f32 0.0, %v306
  %v308 = vpop.f32.mrb[0].mxu0
  %v309 = vadd.f32 0.0, %v308
  %v310 = vpop.f32.mrb[0].mxu0
  %v311 = vadd.f32 0.0, %v310
  %312 = vmatprep.mubr.bf16.mxu0 0
  %313 = vmatmul.mubr.bf16.gmra.mrb[0].mxu0 %v175
  %v314 = vpop.f32.mrb[0].mxu0
  %v315 = vadd.f32 0.0, %v314
  %v316 = vpop.f32.mrb[0].mxu0
  %v317 = vadd.f32 0.0, %v316
  %v318 = vpop.f32.mrb[0].mxu0
  %v319 = vadd.f32 0.0, %v318
  %v320 = vpop.f32.mrb[0].mxu0
  %v321 = vadd.f32 0.0, %v320
  %322 = vmatprep.mubr.bf16.mxu0 0
  %323 = vmatmul.mubr.bf16.gmra.mrb[0].mxu0 %v178
  %v324 = vpop.f32.mrb[0].mxu0
  %v325 = vadd.f32 0.0, %v324
  %v326 = vpop.f32.mrb[0].mxu0
  %v327 = vadd.f32 0.0, %v326
  %v328 = vpop.f32.mrb[0].mxu0
  %v329 = vadd.f32 0.0, %v328
  %v330 = vpop.f32.mrb[0].mxu0
  %v331 = vadd.f32 0.0, %v330
  %332 = vdwg.mxu0
  %333 = vmatprep.subr.bf16.mxu0 %v132
  %334 = vmatpush1.bf16.msra.mxu0 %v131
  %335 = vmatprep.subr.bf16.mxu0 0
  %336 = vmatpush1.bf16.msra.mxu0 0
  %337 = vmatprep.subr.bf16.mxu0 0
  %338 = vmatpush1.bf16.msra.mxu0 0
  %339 = vmatprep.subr.bf16.mxu0 0
  %340 = vmatpush1.bf16.msra.mxu0 0
  %341 = vmatprep.subr.bf16.mxu0 0
  %342 = vmatpush1.bf16.msra.mxu0 0
  %343 = vmatprep.subr.bf16.mxu0 0
  %344 = vmatpush1.bf16.msra.mxu0 0
  %345 = vmatprep.subr.bf16.mxu0 0
  %346 = vmatpush1.bf16.msra.mxu0 0
  %347 = vmatprep.subr.bf16.mxu0 0
  %348 = vmatpush1.bf16.msra.mxu0 0
  %349 = vmatprep.subr.bf16.mxu0 0
  %350 = vmatpush1.bf16.msra.mxu0 0
  %351 = vmatprep.subr.bf16.mxu0 0
  %352 = vmatpush1.bf16.msra.mxu0 0
  %353 = vmatprep.subr.bf16.mxu0 0
  %354 = vmatpush1.bf16.msra.mxu0 0
  %355 = vmatprep.subr.bf16.mxu0 0
  %356 = vmatpush1.bf16.msra.mxu0 0
  %357 = vmatprep.subr.bf16.mxu0 0
  %358 = vmatpush1.bf16.msra.mxu0 0
  %359 = vmatprep.subr.bf16.mxu0 0
  %360 = vmatpush1.bf16.msra.mxu0 0
  %361 = vmatprep.subr.bf16.mxu0 0
  %362 = vmatpush1.bf16.msra.mxu0 0
  %363 = vmatprep.subr.bf16.mxu0 0
  %364 = vmatpush1.bf16.msra.mxu0 0
  %365 = vmatprep.mubr.bf16.mxu0 0
  %366 = vmatmul.mubr.bf16.gmra.mrb[0].mxu0 %v145
  %v367 = vpop.f32.mrb[0].mxu0
  %v368 = vadd.f32 0.0, %v367
  %v369 = vpop.f32.mrb[0].mxu0
  %v370 = vadd.f32 0.0, %v369
  %v371 = vpop.f32.mrb[0].mxu0
  %v372 = vadd.f32 0.0, %v371
  %v373 = vpop.f32.mrb[0].mxu0
  %v374 = vadd.f32 0.0, %v373
  %375 = vmatprep.mubr.bf16.mxu0 0
  %376 = vmatmul.mubr.bf16.gmra.mrb[0].mxu0 %v148
  %v377 = vpop.f32.mrb[0].mxu0
  %v378 = vadd.f32 0.0, %v377
  %v379 = vpop.f32.mrb[0].mxu0
  %v380 = vadd.f32 0.0, %v379
  %v381 = vpop.f32.mrb[0].mxu0
  %v382 = vadd.f32 0.0, %v381
  %v383 = vpop.f32.mrb[0].mxu0
  %v384 = vadd.f32 0.0, %v383
  %385 = vmatprep.mubr.bf16.mxu0 0
  %386 = vmatmul.mubr.bf16.gmra.mrb[0].mxu0 %v151
  %v387 = vpop.f32.mrb[0].mxu0
  %v388 = vadd.f32 0.0, %v387
  %v389 = vpop.f32.mrb[0].mxu0
  %v390 = vadd.f32 0.0, %v389
  %v391 = vpop.f32.mrb[0].mxu0
  %v392 = vadd.f32 0.0, %v391
  %v393 = vpop.f32.mrb[0].mxu0
  %v394 = vadd.f32 0.0, %v393
  %395 = vmatprep.mubr.bf16.mxu0 0
  %396 = vmatmul.mubr.bf16.gmra.mrb[0].mxu0 %v154
  %v397 = vpop.f32.mrb[0].mxu0
  %v398 = vadd.f32 0.0, %v397
  %v399 = vpop.f32.mrb[0].mxu0
  %v400 = vadd.f32 0.0, %v399
  %v401 = vpop.f32.mrb[0].mxu0
  %v402 = vadd.f32 0.0, %v401
  %v403 = vpop.f32.mrb[0].mxu0
  %v404 = vadd.f32 0.0, %v403
  %405 = vmatprep.mubr.bf16.mxu0 0
  %406 = vmatmul.mubr.bf16.gmra.mrb[0].mxu0 %v157
  %v407 = vpop.f32.mrb[0].mxu0
  %v408 = vadd.f32 0.0, %v407
  %v409 = vpop.f32.mrb[0].mxu0
  %v410 = vadd.f32 0.0, %v409
  %v411 = vpop.f32.mrb[0].mxu0
  %v412 = vadd.f32 0.0, %v411
  %v413 = vpop.f32.mrb[0].mxu0
  %v414 = vadd.f32 0.0, %v413
  %415 = vmatprep.mubr.bf16.mxu0 0
  %416 = vmatmul.mubr.bf16.gmra.mrb[0].mxu0 %v160
  %v417 = vpop.f32.mrb[0].mxu0
  %v418 = vadd.f32 0.0, %v417
  %v419 = vpop.f32.mrb[0].mxu0
  %v420 = vadd.f32 0.0, %v419
  %v421 = vpop.f32.mrb[0].mxu0
  %v422 = vadd.f32 0.0, %v421
  %v423 = vpop.f32.mrb[0].mxu0
  %v424 = vadd.f32 0.0, %v423
  %425 = vmatprep.mubr.bf16.mxu0 0
  %426 = vmatmul.mubr.bf16.gmra.mrb[0].mxu0 %v163
  %v427 = vpop.f32.mrb[0].mxu0
  %v428 = vadd.f32 0.0, %v427
  %v429 = vpop.f32.mrb[0].mxu0
  %v430 = vadd.f32 0.0, %v429
  %v431 = vpop.f32.mrb[0].mxu0
  %v432 = vadd.f32 0.0, %v431
  %v433 = vpop.f32.mrb[0].mxu0
  %v434 = vadd.f32 0.0, %v433
  %435 = vmatprep.mubr.bf16.mxu0 0
  %436 = vmatmul.mubr.bf16.gmra.mrb[0].mxu0 %v166
  %v437 = vpop.f32.mrb[0].mxu0
  %v438 = vadd.f32 0.0, %v437
  %v439 = vpop.f32.mrb[0].mxu0
  %v440 = vadd.f32 0.0, %v439
  %v441 = vpop.f32.mrb[0].mxu0
  %v442 = vadd.f32 0.0, %v441
  %v443 = vpop.f32.mrb[0].mxu0
  %v444 = vadd.f32 0.0, %v443
  %445 = vmatprep.mubr.bf16.mxu0 0
  %446 = vmatmul.mubr.bf16.gmra.mrb[0].mxu0 %v169
  %v447 = vpop.f32.mrb[0].mxu0
  %v448 = vadd.f32 0.0, %v447
  %v449 = vpop.f32.mrb[0].mxu0
  %v450 = vadd.f32 0.0, %v449
  %v451 = vpop.f32.mrb[0].mxu0
  %v452 = vadd.f32 0.0, %v451
  %v453 = vpop.f32.mrb[0].mxu0
  %v454 = vadd.f32 0.0, %v453
  %455 = vmatprep.mubr.bf16.mxu0 0
  %456 = vmatmul.mubr.bf16.gmra.mrb[0].mxu0 %v172
  %v457 = vpop.f32.mrb[0].mxu0
  %v458 = vadd.f32 0.0, %v457
  %v459 = vpop.f32.mrb[0].mxu0
  %v460 = vadd.f32 0.0, %v459
  %v461 = vpop.f32.mrb[0].mxu0
  %v462 = vadd.f32 0.0, %v461
  %v463 = vpop.f32.mrb[0].mxu0
  %v464 = vadd.f32 0.0, %v463
  %465 = vmatprep.mubr.bf16.mxu0 0
  %466 = vmatmul.mubr.bf16.gmra.mrb[0].mxu0 %v175
  %v467 = vpop.f32.mrb[0].mxu0
  %v468 = vadd.f32 0.0, %v467
  %v469 = vpop.f32.mrb[0].mxu0
  %v470 = vadd.f32 0.0, %v469
  %v471 = vpop.f32.mrb[0].mxu0
  %v472 = vadd.f32 0.0, %v471
  %v473 = vpop.f32.mrb[0].mxu0
  %v474 = vadd.f32 0.0, %v473
  %475 = vmatprep.mubr.bf16.mxu0 0
  %476 = vmatmul.mubr.bf16.gmra.mrb[0].mxu0 %v178
  %v477 = vpop.f32.mrb[0].mxu0
  %v478 = vadd.f32 0.0, %v477
  %v479 = vpop.f32.mrb[0].mxu0
  %v480 = vadd.f32 0.0, %v479
  %v481 = vpop.f32.mrb[0].mxu0
  %v482 = vadd.f32 0.0, %v481
  %v483 = vpop.f32.mrb[0].mxu0
  %v484 = vadd.f32 0.0, %v483
  %485 = vdwg.mxu0
  %486 = vmatprep.subr.bf16.mxu0 %v134
  %487 = vmatpush1.bf16.msra.mxu0 %v133
  %488 = vmatprep.subr.bf16.mxu0 0
  %489 = vmatpush1.bf16.msra.mxu0 0
  %490 = vmatprep.subr.bf16.mxu0 0
  %491 = vmatpush1.bf16.msra.mxu0 0
  %492 = vmatprep.subr.bf16.mxu0 0
  %493 = vmatpush1.bf16.msra.mxu0 0
  %494 = vmatprep.subr.bf16.mxu0 0
  %495 = vmatpush1.bf16.msra.mxu0 0
  %496 = vmatprep.subr.bf16.mxu0 0
  %497 = vmatpush1.bf16.msra.mxu0 0
  %498 = vmatprep.subr.bf16.mxu0 0
  %499 = vmatpush1.bf16.msra.mxu0 0
  %500 = vmatprep.subr.bf16.mxu0 0
  %501 = vmatpush1.bf16.msra.mxu0 0
  %502 = vmatprep.subr.bf16.mxu0 0
  %503 = vmatpush1.bf16.msra.mxu0 0
  %504 = vmatprep.subr.bf16.mxu0 0
  %505 = vmatpush1.bf16.msra.mxu0 0
  %506 = vmatprep.subr.bf16.mxu0 0
  %507 = vmatpush1.bf16.msra.mxu0 0
  %508 = vmatprep.subr.bf16.mxu0 0
  %509 = vmatpush1.bf16.msra.mxu0 0
  %510 = vmatprep.subr.bf16.mxu0 0
  %511 = vmatpush1.bf16.msra.mxu0 0
  %512 = vmatprep.subr.bf16.mxu0 0
  %513 = vmatpush1.bf16.msra.mxu0 0
  %514 = vmatprep.subr.bf16.mxu0 0
  %515 = vmatpush1.bf16.msra.mxu0 0
  %516 = vmatprep.subr.bf16.mxu0 0
  %517 = vmatpush1.bf16.msra.mxu0 0
  %518 = vmatprep.mubr.bf16.mxu0 0
  %519 = vmatmul.mubr.bf16.gmra.mrb[0].mxu0 %v145
  %v520 = vpop.f32.mrb[0].mxu0
  %v521 = vadd.f32 0.0, %v520
  %v522 = vpop.f32.mrb[0].mxu0
  %v523 = vadd.f32 0.0, %v522
  %v524 = vpop.f32.mrb[0].mxu0
  %v525 = vadd.f32 0.0, %v524
  %v526 = vpop.f32.mrb[0].mxu0
  %v527 = vadd.f32 0.0, %v526
  %528 = vmatprep.mubr.bf16.mxu0 0
  %529 = vmatmul.mubr.bf16.gmra.mrb[0].mxu0 %v148
  %v530 = vpop.f32.mrb[0].mxu0
  %v531 = vadd.f32 0.0, %v530
  %v532 = vpop.f32.mrb[0].mxu0
  %v533 = vadd.f32 0.0, %v532
  %v534 = vpop.f32.mrb[0].mxu0
  %v535 = vadd.f32 0.0, %v534
  %v536 = vpop.f32.mrb[0].mxu0
  %v537 = vadd.f32 0.0, %v536
  %538 = vmatprep.mubr.bf16.mxu0 0
  %539 = vmatmul.mubr.bf16.gmra.mrb[0].mxu0 %v151
  %v540 = vpop.f32.mrb[0].mxu0
  %v541 = vadd.f32 0.0, %v540
  %v542 = vpop.f32.mrb[0].mxu0
  %v543 = vadd.f32 0.0, %v542
  %v544 = vpop.f32.mrb[0].mxu0
  %v545 = vadd.f32 0.0, %v544
  %v546 = vpop.f32.mrb[0].mxu0
  %v547 = vadd.f32 0.0, %v546
  %548 = vmatprep.mubr.bf16.mxu0 0
  %549 = vmatmul.mubr.bf16.gmra.mrb[0].mxu0 %v154
  %v550 = vpop.f32.mrb[0].mxu0
  %v551 = vadd.f32 0.0, %v550
  %v552 = vpop.f32.mrb[0].mxu0
  %v553 = vadd.f32 0.0, %v552
  %v554 = vpop.f32.mrb[0].mxu0
  %v555 = vadd.f32 0.0, %v554
  %v556 = vpop.f32.mrb[0].mxu0
  %v557 = vadd.f32 0.0, %v556
  %558 = vmatprep.mubr.bf16.mxu0 0
  %559 = vmatmul.mubr.bf16.gmra.mrb[0].mxu0 %v157
  %v560 = vpop.f32.mrb[0].mxu0
  %v561 = vadd.f32 0.0, %v560
  %v562 = vpop.f32.mrb[0].mxu0
  %v563 = vadd.f32 0.0, %v562
  %v564 = vpop.f32.mrb[0].mxu0
  %v565 = vadd.f32 0.0, %v564
  %v566 = vpop.f32.mrb[0].mxu0
  %v567 = vadd.f32 0.0, %v566
  %568 = vmatprep.mubr.bf16.mxu0 0
  %569 = vmatmul.mubr.bf16.gmra.mrb[0].mxu0 %v160
  %v570 = vpop.f32.mrb[0].mxu0
  %v571 = vadd.f32 0.0, %v570
  %v572 = vpop.f32.mrb[0].mxu0
  %v573 = vadd.f32 0.0, %v572
  %v574 = vpop.f32.mrb[0].mxu0
  %v575 = vadd.f32 0.0, %v574
  %v576 = vpop.f32.mrb[0].mxu0
  %v577 = vadd.f32 0.0, %v576
  %578 = vmatprep.mubr.bf16.mxu0 0
  %579 = vmatmul.mubr.bf16.gmra.mrb[0].mxu0 %v163
  %v580 = vpop.f32.mrb[0].mxu0
  %v581 = vadd.f32 0.0, %v580
  %v582 = vpop.f32.mrb[0].mxu0
  %v583 = vadd.f32 0.0, %v582
  %v584 = vpop.f32.mrb[0].mxu0
  %v585 = vadd.f32 0.0, %v584
  %v586 = vpop.f32.mrb[0].mxu0
  %v587 = vadd.f32 0.0, %v586
  %588 = vmatprep.mubr.bf16.mxu0 0
  %589 = vmatmul.mubr.bf16.gmra.mrb[0].mxu0 %v166
  %v590 = vpop.f32.mrb[0].mxu0
  %v591 = vadd.f32 0.0, %v590
  %v592 = vpop.f32.mrb[0].mxu0
  %v593 = vadd.f32 0.0, %v592
  %v594 = vpop.f32.mrb[0].mxu0
  %v595 = vadd.f32 0.0, %v594
  %v596 = vpop.f32.mrb[0].mxu0
  %v597 = vadd.f32 0.0, %v596
  %598 = vmatprep.mubr.bf16.mxu0 0
  %599 = vmatmul.mubr.bf16.gmra.mrb[0].mxu0 %v169
  %v600 = vpop.f32.mrb[0].mxu0
  %v601 = vadd.f32 0.0, %v600
  %v602 = vpop.f32.mrb[0].mxu0
  %v603 = vadd.f32 0.0, %v602
  %v604 = vpop.f32.mrb[0].mxu0
  %v605 = vadd.f32 0.0, %v604
  %v606 = vpop.f32.mrb[0].mxu0
  %v607 = vadd.f32 0.0, %v606
  %608 = vmatprep.mubr.bf16.mxu0 0
  %609 = vmatmul.mubr.bf16.gmra.mrb[0].mxu0 %v172
  %v610 = vpop.f32.mrb[0].mxu0
  %v611 = vadd.f32 0.0, %v610
  %v612 = vpop.f32.mrb[0].mxu0
  %v613 = vadd.f32 0.0, %v612
  %v614 = vpop.f32.mrb[0].mxu0
  %v615 = vadd.f32 0.0, %v614
  %v616 = vpop.f32.mrb[0].mxu0
  %v617 = vadd.f32 0.0, %v616
  %618 = vmatprep.mubr.bf16.mxu0 0
  %619 = vmatmul.mubr.bf16.gmra.mrb[0].mxu0 %v175
  %v620 = vpop.f32.mrb[0].mxu0
  %v621 = vadd.f32 0.0, %v620
  %v622 = vpop.f32.mrb[0].mxu0
  %v623 = vadd.f32 0.0, %v622
  %v624 = vpop.f32.mrb[0].mxu0
  %v625 = vadd.f32 0.0, %v624
  %v626 = vpop.f32.mrb[0].mxu0
  %v627 = vadd.f32 0.0, %v626
  %628 = vmatprep.mubr.bf16.mxu0 0
  %629 = vmatmul.mubr.bf16.gmra.mrb[0].mxu0 %v178
  %v630 = vpop.f32.mrb[0].mxu0
  %v631 = vadd.f32 0.0, %v630
  %v632 = vpop.f32.mrb[0].mxu0
  %v633 = vadd.f32 0.0, %v632
  %v634 = vpop.f32.mrb[0].mxu0
  %v635 = vadd.f32 0.0, %v634
  %v636 = vpop.f32.mrb[0].mxu0
  %v637 = vadd.f32 0.0, %v636
  %638 = vdwg.mxu0
  %639 = vmatprep.subr.bf16.mxu0 0
  %640 = vmatpush1.bf16.msra.mxu0 %v135
  %641 = vmatprep.subr.bf16.mxu0 0
  %642 = vmatpush1.bf16.msra.mxu0 0
  %643 = vmatprep.subr.bf16.mxu0 0
  %644 = vmatpush1.bf16.msra.mxu0 0
  %645 = vmatprep.subr.bf16.mxu0 0
  %646 = vmatpush1.bf16.msra.mxu0 0
  %647 = vmatprep.subr.bf16.mxu0 0
  %648 = vmatpush1.bf16.msra.mxu0 0
  %649 = vmatprep.subr.bf16.mxu0 0
  %650 = vmatpush1.bf16.msra.mxu0 0
  %651 = vmatprep.subr.bf16.mxu0 0
  %652 = vmatpush1.bf16.msra.mxu0 0
  %653 = vmatprep.subr.bf16.mxu0 0
  %654 = vmatpush1.bf16.msra.mxu0 0
  %655 = vmatprep.subr.bf16.mxu0 0
  %656 = vmatpush1.bf16.msra.mxu0 0
  %657 = vmatprep.subr.bf16.mxu0 0
  %658 = vmatpush1.bf16.msra.mxu0 0
  %659 = vmatprep.subr.bf16.mxu0 0
  %660 = vmatpush1.bf16.msra.mxu0 0
  %661 = vmatprep.subr.bf16.mxu0 0
  %662 = vmatpush1.bf16.msra.mxu0 0
  %663 = vmatprep.subr.bf16.mxu0 0
  %664 = vmatpush1.bf16.msra.mxu0 0
  %665 = vmatprep.subr.bf16.mxu0 0
  %666 = vmatpush1.bf16.msra.mxu0 0
  %667 = vmatprep.subr.bf16.mxu0 0
  %668 = vmatpush1.bf16.msra.mxu0 0
  %669 = vmatprep.subr.bf16.mxu0 0
  %670 = vmatpush1.bf16.msra.mxu0 0
  %671 = vmatprep.mubr.bf16.mxu0 0
  %672 = vmatmul.mubr.bf16.gmra.mrb[0].mxu0 %v145
  %v673 = vpop.f32.mrb[0].mxu0
  %v674 = vadd.f32 0.0, %v673
  %v675 = vpop.f32.mrb[0].mxu0
  %v676 = vpop.f32.mrb[0].mxu0
  %v677 = vadd.f32 0.0, %v676
  %v678 = vpop.f32.mrb[0].mxu0
  %679 = vmatprep.mubr.bf16.mxu0 0
  %680 = vmatmul.mubr.bf16.gmra.mrb[0].mxu0 %v148
  %v681 = vpop.f32.mrb[0].mxu0
  %v682 = vadd.f32 0.0, %v681
  %v683 = vpop.f32.mrb[0].mxu0
  %v684 = vpop.f32.mrb[0].mxu0
  %v685 = vadd.f32 0.0, %v684
  %v686 = vpop.f32.mrb[0].mxu0
  %687 = vmatprep.mubr.bf16.mxu0 0
  %688 = vmatmul.mubr.bf16.gmra.mrb[0].mxu0 %v151
  %v689 = vpop.f32.mrb[0].mxu0
  %v690 = vadd.f32 0.0, %v689
  %v691 = vpop.f32.mrb[0].mxu0
  %v692 = vpop.f32.mrb[0].mxu0
  %v693 = vadd.f32 0.0, %v692
  %v694 = vpop.f32.mrb[0].mxu0
  %695 = vmatprep.mubr.bf16.mxu0 0
  %696 = vmatmul.mubr.bf16.gmra.mrb[0].mxu0 %v154
  %v697 = vpop.f32.mrb[0].mxu0
  %v698 = vadd.f32 0.0, %v697
  %v699 = vpop.f32.mrb[0].mxu0
  %v700 = vpop.f32.mrb[0].mxu0
  %v701 = vadd.f32 0.0, %v700
  %v702 = vpop.f32.mrb[0].mxu0
  %703 = vmatprep.mubr.bf16.mxu0 0
  %704 = vmatmul.mubr.bf16.gmra.mrb[0].mxu0 %v157
  %v705 = vpop.f32.mrb[0].mxu0
  %v706 = vadd.f32 0.0, %v705
  %v707 = vpop.f32.mrb[0].mxu0
  %v708 = vpop.f32.mrb[0].mxu0
  %v709 = vadd.f32 0.0, %v708
  %v710 = vpop.f32.mrb[0].mxu0
  %711 = vmatprep.mubr.bf16.mxu0 0
  %712 = vmatmul.mubr.bf16.gmra.mrb[0].mxu0 %v160
  %v713 = vpop.f32.mrb[0].mxu0
  %v714 = vadd.f32 0.0, %v713
  %v715 = vpop.f32.mrb[0].mxu0
  %v716 = vpop.f32.mrb[0].mxu0
  %v717 = vadd.f32 0.0, %v716
  %v718 = vpop.f32.mrb[0].mxu0
  %719 = vmatprep.mubr.bf16.mxu0 0
  %720 = vmatmul.mubr.bf16.gmra.mrb[0].mxu0 %v163
  %v721 = vpop.f32.mrb[0].mxu0
  %v722 = vadd.f32 0.0, %v721
  %v723 = vpop.f32.mrb[0].mxu0
  %v724 = vpop.f32.mrb[0].mxu0
  %v725 = vadd.f32 0.0, %v724
  %v726 = vpop.f32.mrb[0].mxu0
  %727 = vmatprep.mubr.bf16.mxu0 0
  %728 = vmatmul.mubr.bf16.gmra.mrb[0].mxu0 %v166
  %v729 = vpop.f32.mrb[0].mxu0
  %v730 = vadd.f32 0.0, %v729
  %v731 = vpop.f32.mrb[0].mxu0
  %v732 = vpop.f32.mrb[0].mxu0
  %v733 = vadd.f32 0.0, %v732
  %v734 = vpop.f32.mrb[0].mxu0
  %735 = vmatprep.mubr.bf16.mxu0 0
  %736 = vmatmul.mubr.bf16.gmra.mrb[0].mxu0 %v169
  %v737 = vpop.f32.mrb[0].mxu0
  %v738 = vadd.f32 0.0, %v737
  %v739 = vpop.f32.mrb[0].mxu0
  %v740 = vpop.f32.mrb[0].mxu0
  %v741 = vadd.f32 0.0, %v740
  %v742 = vpop.f32.mrb[0].mxu0
  %743 = vmatprep.mubr.bf16.mxu0 0
  %744 = vmatmul.mubr.bf16.gmra.mrb[0].mxu0 %v172
  %v745 = vpop.f32.mrb[0].mxu0
  %v746 = vadd.f32 0.0, %v745
  %v747 = vpop.f32.mrb[0].mxu0
  %v748 = vpop.f32.mrb[0].mxu0
  %v749 = vadd.f32 0.0, %v748
  %v750 = vpop.f32.mrb[0].mxu0
  %751 = vmatprep.mubr.bf16.mxu0 0
  %752 = vmatmul.mubr.bf16.gmra.mrb[0].mxu0 %v175
  %v753 = vpop.f32.mrb[0].mxu0
  %v754 = vadd.f32 0.0, %v753
  %v755 = vpop.f32.mrb[0].mxu0
  %v756 = vpop.f32.mrb[0].mxu0
  %v757 = vadd.f32 0.0, %v756
  %v758 = vpop.f32.mrb[0].mxu0
  %759 = vmatprep.mubr.bf16.mxu0 0
  %760 = vmatmul.mubr.bf16.gmra.mrb[0].mxu0 %v178
  %v761 = vpop.f32.mrb[0].mxu0
  %v762 = vadd.f32 0.0, %v761
  %v763 = vpop.f32.mrb[0].mxu0
  %v764 = vpop.f32.mrb[0].mxu0
  %v765 = vadd.f32 0.0, %v764
  %v766 = vpop.f32.mrb[0].mxu0
  %767 = vdwg.mxu0
  %v768 = vld [vmem:[%s1] sm:$0xff]
  %v769 = vld [vmem:[%s1 + $0x8] sm:$0xff]
  %v770 = vld [vmem:[%s1 + $0x10] sm:$0xff]
  %v771 = vld [vmem:[%s1 + $0x18] sm:$0xf]
  %v772 = vld [vmem:[%s1 + $0x54] sm:$0xff]
  %v773 = vld [vmem:[%s1 + $0x5c] sm:$0xff]
  %v774 = vld [vmem:[%s1 + $0x64] sm:$0xff]
  %v775 = vld [vmem:[%s1 + $0x6c] sm:$0xf]
  %v776 = vunpack.c.l.bf16 %v768
  %v777 = vunpack.c.h.bf16 %v768
  %v778 = vunpack.c.l.bf16 %v769
  %v779 = vunpack.c.h.bf16 %v769
  %v780 = vunpack.c.l.bf16 %v770
  %v781 = vunpack.c.h.bf16 %v770
  %v782 = vunpack.c.l.bf16 %v771
  %v783 = vunpack.c.l.bf16 %v772
  %v784 = vunpack.c.h.bf16 %v772
  %v785 = vunpack.c.l.bf16 %v773
  %v786 = vunpack.c.h.bf16 %v773
  %v787 = vunpack.c.l.bf16 %v774
  %v788 = vunpack.c.h.bf16 %v774
  %v789 = vunpack.c.l.bf16 %v775
  %v790 = vld [vmem:[%s1 + $0x1c] sm:$0xff]
  %v791 = vld [vmem:[%s1 + $0x24] sm:$0xff]
  %v792 = vld [vmem:[%s1 + $0x2c] sm:$0xff]
  %v793 = vld [vmem:[%s1 + $0x34] sm:$0xf]
  %v794 = vld [vmem:[%s1 + $0x70] sm:$0xff]
  %v795 = vld [vmem:[%s1 + $0x78] sm:$0xff]
  %v796 = vld [vmem:[%s1 + $0x80] sm:$0xff]
  %v797 = vld [vmem:[%s1 + $0x88] sm:$0xf]
  %v798 = vunpack.c.l.bf16 %v790
  %v799 = vunpack.c.h.bf16 %v790
  %v800 = vunpack.c.l.bf16 %v791
  %v801 = vunpack.c.h.bf16 %v791
  %v802 = vunpack.c.l.bf16 %v792
  %v803 = vunpack.c.h.bf16 %v792
  %v804 = vunpack.c.l.bf16 %v793
  %v805 = vunpack.c.l.bf16 %v794
  %v806 = vunpack.c.h.bf16 %v794
  %v807 = vunpack.c.l.bf16 %v795
  %v808 = vunpack.c.h.bf16 %v795
  %v809 = vunpack.c.l.bf16 %v796
  %v810 = vunpack.c.h.bf16 %v796
  %v811 = vunpack.c.l.bf16 %v797
  %v812 = vld [vmem:[%s1 + $0x38] sm:$0xff]
  %v813 = vld [vmem:[%s1 + $0x40] sm:$0xff]
  %v814 = vld [vmem:[%s1 + $0x48] sm:$0xff]
  %v815 = vld [vmem:[%s1 + $0x50] sm:$0xf]
  %v816 = vld [vmem:[%s1 + $0x8c] sm:$0xff]
  %v817 = vld [vmem:[%s1 + $0x94] sm:$0xff]
  %v818 = vld [vmem:[%s1 + $0x9c] sm:$0xff]
  %v819 = vld [vmem:[%s1 + $0xa4] sm:$0xf]
  %v820 = vunpack.c.l.bf16 %v812
  %v821 = vunpack.c.h.bf16 %v812
  %v822 = vunpack.c.l.bf16 %v813
  %v823 = vunpack.c.h.bf16 %v813
  %v824 = vunpack.c.l.bf16 %v814
  %v825 = vunpack.c.h.bf16 %v814
  %v826 = vunpack.c.l.bf16 %v815
  %v827 = vunpack.c.l.bf16 %v816
  %v828 = vunpack.c.h.bf16 %v816
  %v829 = vunpack.c.l.bf16 %v817
  %v830 = vunpack.c.h.bf16 %v817
  %v831 = vunpack.c.l.bf16 %v818
  %v832 = vunpack.c.h.bf16 %v818
  %v833 = vunpack.c.l.bf16 %v819
  %v834 = vmul.f32 %v215, %v776
  %v835 = vmul.f32 %v217, %v777
  %v836 = vmul.f32 %v368, %v778
  %v837 = vmul.f32 %v370, %v779
  %v838 = vmul.f32 %v521, %v780
  %v839 = vmul.f32 %v523, %v781
  %v840 = vmul.f32 %v674, %v782
  %v841 = vmul.f32 %v219, %v783
  %v842 = vmul.f32 %v221, %v784
  %v843 = vmul.f32 %v372, %v785
  %v844 = vmul.f32 %v374, %v786
  %v845 = vmul.f32 %v525, %v787
  %v846 = vmul.f32 %v527, %v788
  %v847 = vmul.f32 %v677, %v789
  %v848 = vadd.f32 %v245, %v834
  %v849 = vadd.f32 %v247, %v835
  %v850 = vadd.f32 %v398, %v836
  %v851 = vadd.f32 %v400, %v837
  %v852 = vadd.f32 %v551, %v838
  %v853 = vadd.f32 %v553, %v839
  %v854 = vadd.f32 %v698, %v840
  %v855 = vadd.f32 %v249, %v841
  %v856 = vadd.f32 %v251, %v842
  %v857 = vadd.f32 %v402, %v843
  %v858 = vadd.f32 %v404, %v844
  %v859 = vadd.f32 %v555, %v845
  %v860 = vadd.f32 %v557, %v846
  %v861 = vadd.f32 %v701, %v847
  %v862 = vmul.f32 %v225, %v798
  %v863 = vmul.f32 %v227, %v799
  %v864 = vmul.f32 %v378, %v800
  %v865 = vmul.f32 %v380, %v801
  %v866 = vmul.f32 %v531, %v802
  %v867 = vmul.f32 %v533, %v803
  %v868 = vmul.f32 %v682, %v804
  %v869 = vmul.f32 %v229, %v805
  %v870 = vmul.f32 %v231, %v806
  %v871 = vmul.f32 %v382, %v807
  %v872 = vmul.f32 %v384, %v808
  %v873 = vmul.f32 %v535, %v809
  %v874 = vmul.f32 %v537, %v810
  %v875 = vmul.f32 %v685, %v811
  %v876 = vadd.f32 %v848, %v862
  %v877 = vadd.f32 %v849, %v863
  %v878 = vadd.f32 %v850, %v864
  %v879 = vadd.f32 %v851, %v865
  %v880 = vadd.f32 %v852, %v866
  %v881 = vadd.f32 %v853, %v867
  %v882 = vadd.f32 %v854, %v868
  %v883 = vadd.f32 %v855, %v869
  %v884 = vadd.f32 %v856, %v870
  %v885 = vadd.f32 %v857, %v871
  %v886 = vadd.f32 %v858, %v872
  %v887 = vadd.f32 %v859, %v873
  %v888 = vadd.f32 %v860, %v874
  %v889 = vadd.f32 %v861, %v875
  %v890 = vmul.f32 %v235, %v820
  %v891 = vmul.f32 %v237, %v821
  %v892 = vmul.f32 %v388, %v822
  %v893 = vmul.f32 %v390, %v823
  %v894 = vmul.f32 %v541, %v824
  %v895 = vmul.f32 %v543, %v825
  %v896 = vmul.f32 %v690, %v826
  %v897 = vmul.f32 %v239, %v827
  %v898 = vmul.f32 %v241, %v828
  %v899 = vmul.f32 %v392, %v829
  %v900 = vmul.f32 %v394, %v830
  %v901 = vmul.f32 %v545, %v831
  %v902 = vmul.f32 %v547, %v832
  %v903 = vmul.f32 %v693, %v833
  %v904 = vadd.f32 %v876, %v890
  %v905 = vadd.f32 %v877, %v891
  %v906 = vadd.f32 %v878, %v892
  %v907 = vadd.f32 %v879, %v893
  %v908 = vadd.f32 %v880, %v894
  %v909 = vadd.f32 %v881, %v895
  %v910 = vadd.f32 %v882, %v896
  %v911 = vadd.f32 %v883, %v897
  %v912 = vadd.f32 %v884, %v898
  %v913 = vadd.f32 %v885, %v899
  %v914 = vadd.f32 %v886, %v900
  %v915 = vadd.f32 %v887, %v901
  %v916 = vadd.f32 %v888, %v902
  %v917 = vadd.f32 %v889, %v903
  %918 = vst [vmem:[%s3] sm:$0xff] %v904
  %919 = vst [vmem:[%s3 + $0x8] sm:$0xff] %v905
  %920 = vst [vmem:[%s3 + $0x10] sm:$0xff] %v906
  %921 = vst [vmem:[%s3 + $0x18] sm:$0xff] %v907
  %922 = vst [vmem:[%s3 + $0x20] sm:$0xff] %v908
  %923 = vst [vmem:[%s3 + $0x28] sm:$0xff] %v909
  %924 = vst [vmem:[%s3 + $0x30] sm:$0xff] %v910
  %925 = vst [vmem:[%s3 + $0xa8] sm:$0xff] %v911
  %926 = vst [vmem:[%s3 + $0xb0] sm:$0xff] %v912
  %927 = vst [vmem:[%s3 + $0xb8] sm:$0xff] %v913
  %928 = vst [vmem:[%s3 + $0xc0] sm:$0xff] %v914
  %929 = vst [vmem:[%s3 + $0xc8] sm:$0xff] %v915
  %930 = vst [vmem:[%s3 + $0xd0] sm:$0xff] %v916
  %931 = vst [vmem:[%s3 + $0xd8] sm:$0xff] %v917
  %v932 = vmul.f32 %v255, %v776
  %v933 = vmul.f32 %v257, %v777
  %v934 = vmul.f32 %v408, %v778
  %v935 = vmul.f32 %v410, %v779
  %v936 = vmul.f32 %v561, %v780
  %v937 = vmul.f32 %v563, %v781
  %v938 = vmul.f32 %v706, %v782
  %v939 = vmul.f32 %v259, %v783
  %v940 = vmul.f32 %v261, %v784
  %v941 = vmul.f32 %v412, %v785
  %v942 = vmul.f32 %v414, %v786
  %v943 = vmul.f32 %v565, %v787
  %v944 = vmul.f32 %v567, %v788
  %v945 = vmul.f32 %v709, %v789
  %v946 = vadd.f32 %v285, %v932
  %v947 = vadd.f32 %v287, %v933
  %v948 = vadd.f32 %v438, %v934
  %v949 = vadd.f32 %v440, %v935
  %v950 = vadd.f32 %v591, %v936
  %v951 = vadd.f32 %v593, %v937
  %v952 = vadd.f32 %v730, %v938
  %v953 = vadd.f32 %v289, %v939
  %v954 = vadd.f32 %v291, %v940
  %v955 = vadd.f32 %v442, %v941
  %v956 = vadd.f32 %v444, %v942
  %v957 = vadd.f32 %v595, %v943
  %v958 = vadd.f32 %v597, %v944
  %v959 = vadd.f32 %v733, %v945
  %v960 = vmul.f32 %v265, %v798
  %v961 = vmul.f32 %v267, %v799
  %v962 = vmul.f32 %v418, %v800
  %v963 = vmul.f32 %v420, %v801
  %v964 = vmul.f32 %v571, %v802
  %v965 = vmul.f32 %v573, %v803
  %v966 = vmul.f32 %v714, %v804
  %v967 = vmul.f32 %v269, %v805
  %v968 = vmul.f32 %v271, %v806
  %v969 = vmul.f32 %v422, %v807
  %v970 = vmul.f32 %v424, %v808
  %v971 = vmul.f32 %v575, %v809
  %v972 = vmul.f32 %v577, %v810
  %v973 = vmul.f32 %v717, %v811
  %v974 = vadd.f32 %v946, %v960
  %v975 = vadd.f32 %v947, %v961
  %v976 = vadd.f32 %v948, %v962
  %v977 = vadd.f32 %v949, %v963
  %v978 = vadd.f32 %v950, %v964
  %v979 = vadd.f32 %v951, %v965
  %v980 = vadd.f32 %v952, %v966
  %v981 = vadd.f32 %v953, %v967
  %v982 = vadd.f32 %v954, %v968
  %v983 = vadd.f32 %v955, %v969
  %v984 = vadd.f32 %v956, %v970
  %v985 = vadd.f32 %v957, %v971
  %v986 = vadd.f32 %v958, %v972
  %v987 = vadd.f32 %v959, %v973
  %v988 = vmul.f32 %v275, %v820
  %v989 = vmul.f32 %v277, %v821
  %v990 = vmul.f32 %v428, %v822
  %v991 = vmul.f32 %v430, %v823
  %v992 = vmul.f32 %v581, %v824
  %v993 = vmul.f32 %v583, %v825
  %v994 = vmul.f32 %v722, %v826
  %v995 = vmul.f32 %v279, %v827
  %v996 = vmul.f32 %v281, %v828
  %v997 = vmul.f32 %v432, %v829
  %v998 = vmul.f32 %v434, %v830
  %v999 = vmul.f32 %v585, %v831
  %v1000 = vmul.f32 %v587, %v832
  %v1001 = vmul.f32 %v725, %v833
  %v1002 = vadd.f32 %v974, %v988
  %v1003 = vadd.f32 %v975, %v989
  %v1004 = vadd.f32 %v976, %v990
  %v1005 = vadd.f32 %v977, %v991
  %v1006 = vadd.f32 %v978, %v992
  %v1007 = vadd.f32 %v979, %v993
  %v1008 = vadd.f32 %v980, %v994
  %v1009 = vadd.f32 %v981, %v995
  %v1010 = vadd.f32 %v982, %v996
  %v1011 = vadd.f32 %v983, %v997
  %v1012 = vadd.f32 %v984, %v998
  %v1013 = vadd.f32 %v985, %v999
  %v1014 = vadd.f32 %v986, %v1000
  %v1015 = vadd.f32 %v987, %v1001
  %1016 = vst [vmem:[%s3 + $0x38] sm:$0xff] %v1002
  %1017 = vst [vmem:[%s3 + $0x40] sm:$0xff] %v1003
  %1018 = vst [vmem:[%s3 + $0x48] sm:$0xff] %v1004
  %1019 = vst [vmem:[%s3 + $0x50] sm:$0xff] %v1005
  %1020 = vst [vmem:[%s3 + $0x58] sm:$0xff] %v1006
  %1021 = vst [vmem:[%s3 + $0x60] sm:$0xff] %v1007
  %1022 = vst [vmem:[%s3 + $0x68] sm:$0xff] %v1008
  %1023 = vst [vmem:[%s3 + $0xe0] sm:$0xff] %v1009
  %1024 = vst [vmem:[%s3 + $0xe8] sm:$0xff] %v1010
  %1025 = vst [vmem:[%s3 + $0xf0] sm:$0xff] %v1011
  %1026 = vst [vmem:[%s3 + $0xf8] sm:$0xff] %v1012
  %1027 = vst [vmem:[%s3 + $0x100] sm:$0xff] %v1013
  %1028 = vst [vmem:[%s3 + $0x108] sm:$0xff] %v1014
  %1029 = vst [vmem:[%s3 + $0x110] sm:$0xff] %v1015
  %v1030 = vmul.f32 %v295, %v776
  %v1031 = vmul.f32 %v297, %v777
  %v1032 = vmul.f32 %v448, %v778
  %v1033 = vmul.f32 %v450, %v779
  %v1034 = vmul.f32 %v601, %v780
  %v1035 = vmul.f32 %v603, %v781
  %v1036 = vmul.f32 %v738, %v782
  %v1037 = vmul.f32 %v299, %v783
  %v1038 = vmul.f32 %v301, %v784
  %v1039 = vmul.f32 %v452, %v785
  %v1040 = vmul.f32 %v454, %v786
  %v1041 = vmul.f32 %v605, %v787
  %v1042 = vmul.f32 %v607, %v788
  %v1043 = vmul.f32 %v741, %v789
  %v1044 = vadd.f32 %v325, %v1030
  %v1045 = vadd.f32 %v327, %v1031
  %v1046 = vadd.f32 %v478, %v1032
  %v1047 = vadd.f32 %v480, %v1033
  %v1048 = vadd.f32 %v631, %v1034
  %v1049 = vadd.f32 %v633, %v1035
  %v1050 = vadd.f32 %v762, %v1036
  %v1051 = vadd.f32 %v329, %v1037
  %v1052 = vadd.f32 %v331, %v1038
  %v1053 = vadd.f32 %v482, %v1039
  %v1054 = vadd.f32 %v484, %v1040
  %v1055 = vadd.f32 %v635, %v1041
  %v1056 = vadd.f32 %v637, %v1042
  %v1057 = vadd.f32 %v765, %v1043
  %v1058 = vmul.f32 %v305, %v798
  %v1059 = vmul.f32 %v307, %v799
  %v1060 = vmul.f32 %v458, %v800
  %v1061 = vmul.f32 %v460, %v801
  %v1062 = vmul.f32 %v611, %v802
  %v1063 = vmul.f32 %v613, %v803
  %v1064 = vmul.f32 %v746, %v804
  %v1065 = vmul.f32 %v309, %v805
  %v1066 = vmul.f32 %v311, %v806
  %v1067 = vmul.f32 %v462, %v807
  %v1068 = vmul.f32 %v464, %v808
  %v1069 = vmul.f32 %v615, %v809
  %v1070 = vmul.f32 %v617, %v810
  %v1071 = vmul.f32 %v749, %v811
  %v1072 = vadd.f32 %v1044, %v1058
  %v1073 = vadd.f32 %v1045, %v1059
  %v1074 = vadd.f32 %v1046, %v1060
  %v1075 = vadd.f32 %v1047, %v1061
  %v1076 = vadd.f32 %v1048, %v1062
  %v1077 = vadd.f32 %v1049, %v1063
  %v1078 = vadd.f32 %v1050, %v1064
  %v1079 = vadd.f32 %v1051, %v1065
  %v1080 = vadd.f32 %v1052, %v1066
  %v1081 = vadd.f32 %v1053, %v1067
  %v1082 = vadd.f32 %v1054, %v1068
  %v1083 = vadd.f32 %v1055, %v1069
  %v1084 = vadd.f32 %v1056, %v1070
  %v1085 = vadd.f32 %v1057, %v1071
  %v1086 = vmul.f32 %v315, %v820
  %v1087 = vmul.f32 %v317, %v821
  %v1088 = vmul.f32 %v468, %v822
  %v1089 = vmul.f32 %v470, %v823
  %v1090 = vmul.f32 %v621, %v824
  %v1091 = vmul.f32 %v623, %v825
  %v1092 = vmul.f32 %v754, %v826
  %v1093 = vmul.f32 %v319, %v827
  %v1094 = vmul.f32 %v321, %v828
  %v1095 = vmul.f32 %v472, %v829
  %v1096 = vmul.f32 %v474, %v830
  %v1097 = vmul.f32 %v625, %v831
  %v1098 = vmul.f32 %v627, %v832
  %v1099 = vmul.f32 %v757, %v833
  %v1100 = vadd.f32 %v1072, %v1086
  %v1101 = vadd.f32 %v1073, %v1087
  %v1102 = vadd.f32 %v1074, %v1088
  %v1103 = vadd.f32 %v1075, %v1089
  %v1104 = vadd.f32 %v1076, %v1090
  %v1105 = vadd.f32 %v1077, %v1091
  %v1106 = vadd.f32 %v1078, %v1092
  %v1107 = vadd.f32 %v1079, %v1093
  %v1108 = vadd.f32 %v1080, %v1094
  %v1109 = vadd.f32 %v1081, %v1095
  %v1110 = vadd.f32 %v1082, %v1096
  %v1111 = vadd.f32 %v1083, %v1097
  %v1112 = vadd.f32 %v1084, %v1098
  %v1113 = vadd.f32 %v1085, %v1099
  %1114 = vst [vmem:[%s3 + $0x70] sm:$0xff] %v1100
  %1115 = vst [vmem:[%s3 + $0x78] sm:$0xff] %v1101
  %1116 = vst [vmem:[%s3 + $0x80] sm:$0xff] %v1102
  %1117 = vst [vmem:[%s3 + $0x88] sm:$0xff] %v1103
  %1118 = vst [vmem:[%s3 + $0x90] sm:$0xff] %v1104
  %1119 = vst [vmem:[%s3 + $0x98] sm:$0xff] %v1105
  %1120 = vst [vmem:[%s3 + $0xa0] sm:$0xff] %v1106
  %1121 = vst [vmem:[%s3 + $0x118] sm:$0xff] %v1107
  %1122 = vst [vmem:[%s3 + $0x120] sm:$0xff] %v1108
  %1123 = vst [vmem:[%s3 + $0x128] sm:$0xff] %v1109
  %1124 = vst [vmem:[%s3 + $0x130] sm:$0xff] %v1110
  %1125 = vst [vmem:[%s3 + $0x138] sm:$0xff] %v1111
  %1126 = vst [vmem:[%s3 + $0x140] sm:$0xff] %v1112
  %1127 = vst [vmem:[%s3 + $0x148] sm:$0xff] %v1113
  // Predicated region
  $region14: #{_lambda_.3} parent=0 // pred_check
    _
  $region15: #{_lambda_.3} parent=0 // pred_check_branch
    %1129 = sbr.rel (0) target = $region17
  $region16: #{_lambda_.3} parent=0 // pred_region
    _
  $region17: #{_lambda_.3} parent=0 // pred_fallthru
    _
  // Predicated region
  $region18: #{_lambda_.3} parent=0 // pred_check
    _
  $region19: #{_lambda_.3} parent=0 // pred_check_branch
    %1131 = sbr.rel (0) target = $region21
  $region20: #{_lambda_.3} parent=0 // pred_region
    _
  $region21: #{_lambda_.3} parent=0 // pred_fallthru
    _

</llo_original>
